<compile_context>
chip_gen: v7x
topology: tpu7x:2x2x1
jax: 0.10.0
libtpu: 0.0.40
codegen_flags: <defaults>
</compile_context>

<pallas_src>
import functools

import jax
import jax.numpy as jnp
import numpy as np
from jax.experimental import pallas as pl
from jax.experimental.pallas import tpu as pltpu

HP = 128   # padded per-gate hidden lane width (one full 128-lane block)
OP = 128   # padded FC output lane width


def gru_fc_kernel(x_ref, wih_ref, whh_ref, bih_ref, bhhn_ref, wfc_ref, bfc_ref,
                  out_ref, gi_all_ref, h_all_ref, *, T, B_pad, H):
    """Whole-sequence GRU + batched Linear, fully VMEM resident.

    x_ref     : (T*B_pad, D_in)  f32   time-major input (row = t*B_pad + b)
    wih_ref   : (D_in, 3*HP)     bf16  per-gate lane-padded (gate order r, z, n)
    whh_ref   : (H,    3*HP)     bf16  K dim NOT padded (real hidden width)
    bih_ref   : (1, 3*HP)        f32   b_ih with b_hh(r,z) pre-folded in
    bhhn_ref  : (1, HP)          f32   recurrent n-gate bias (stays inside r*())
    wfc_ref   : (H, OP)          bf16
    bfc_ref   : (1, OP)          f32
    out_ref   : (T*B_pad, OP)    f32
    gi_all_ref: (T*B_pad, 3*HP)  f32   scratch: hoisted input projection
    h_all_ref : (T*B_pad, HP)    f32   scratch: every timestep's hidden state
    """
    # ---- hoisted, off-critical-path work --------------------------------
    # Input projection for ALL timesteps in one MXU op; parked in VMEM so it
    # does not occupy ~24 vregs across the serial recurrence.
    gi_all_ref[...] = (
        jnp.dot(x_ref[...].astype(jnp.bfloat16), wih_ref[...],
                preferred_element_type=jnp.float32) + bih_ref[...])

    # Recurrent weights: only (H, 3*HP) bf16 now (~6 vregs) — safe to keep live.
    whh = whh_ref[...]
    # Hoist the broadcast of the n-gate recurrent bias out of the loop.
    bhh_n = jnp.broadcast_to(bhhn_ref[...], (B_pad, HP))

    # ---- serial recurrence (fully unrolled; only h @ W_hh on the chain) --
    # h_0 = 0 (matches LanguageDetector.init_hidden); padded lanes stay 0:
    #   gi_pad = gh_pad = bhh_n_pad = 0  =>  r_pad = z_pad = 0.5, n_pad = 0,
    #   h_pad' = 0.5*0 + 0.5*h_pad = 0 by induction.
    h = jnp.zeros((B_pad, HP), jnp.float32)
    for t in range(T):
        gi = gi_all_ref[t * B_pad:(t + 1) * B_pad, :]            # (B_pad, 3*HP)
        gh = jnp.dot(h[:, :H].astype(jnp.bfloat16), whh,
                     preferred_element_type=jnp.float32)          # (B_pad, 3*HP)
        # Whole-vreg (128-lane) gate slices: r, z, n.
        r = jax.nn.sigmoid(gi[:, 0:HP] + gh[:, 0:HP])
        z = jax.nn.sigmoid(gi[:, HP:2 * HP] + gh[:, HP:2 * HP])
        n = jnp.tanh(gi[:, 2 * HP:3 * HP] + r * (gh[:, 2 * HP:3 * HP] + bhh_n))
        h = (1.0 - z) * n + z * h
        h_all_ref[t * B_pad:(t + 1) * B_pad, :] = h               # dense store

    # ---- batched FC after the recurrence: one MXU op, one dense store ----
    out_ref[...] = (
        jnp.dot(h_all_ref[:, :H].astype(jnp.bfloat16), wfc_ref[...],
                preferred_element_type=jnp.float32)
        + bfc_ref[...]).astype(out_ref.dtype)


def prepare_params(params, hidden_size, output_size):
    """One-time parameter repacking (call ONCE, outside the per-call path).

    Pads each gate to HP lanes, folds the r/z recurrent biases into b_ih,
    keeps W_hh / W_fc at their real K width (H rows), and pre-casts the MXU
    weight operands to bf16.
    """
    H, O = hidden_size, output_size

    def pad_gates(w):
        r, z, n = jnp.split(w, 3, axis=-1)
        pad = lambda a: jnp.pad(a, [(0, 0)] * (a.ndim - 1) + [(0, HP - H)])
        return jnp.concatenate([pad(r), pad(z), pad(n)], axis=-1)

    b_ih_r, b_ih_z, b_ih_n = jnp.split(params["b_ih"], 3, axis=-1)
    b_hh_r, b_hh_z, b_hh_n = jnp.split(params["b_hh"], 3, axis=-1)
    # Fold recurrent r/z biases into the hoisted input-projection bias; only
    # the n-gate recurrent bias must stay inside the r*( ) term.
    b_ih_folded = jnp.concatenate(
        [b_ih_r + b_hh_r, b_ih_z + b_hh_z, b_ih_n], axis=-1)

    return {
        "w_ih": pad_gates(params["w_ih"]).astype(jnp.bfloat16),     # (D_in, 3HP)
        "w_hh": pad_gates(params["w_hh"]).astype(jnp.bfloat16),     # (H,    3HP)
        "b_ih": pad_gates(b_ih_folded).astype(jnp.float32),         # (1, 3HP)
        "b_hh_n": jnp.pad(b_hh_n, ((0, 0), (0, HP - H))
                          ).astype(jnp.float32),                    # (1, HP)
        "w_fc": jnp.pad(params["w_fc"], ((0, 0), (0, OP - O))
                        ).astype(jnp.bfloat16),                     # (H, OP)
        "b_fc": jnp.pad(params["b_fc"], ((0, 0), (0, OP - O))
                        ).astype(jnp.float32),                      # (1, OP)
    }


def language_detector_forward(x, prepared, *, hidden_size, output_size):
    """x: (B, T, D_in) float32 -> (B, T, output_size) float32."""
    B, T, D_in = x.shape
    H, O = hidden_size, output_size
    B_pad = max(8, ((B + 7) // 8) * 8)   # full f32 sublane tile per timestep

    # Time-major, row-padded layout so every per-step access is a full vreg.
    x_tm = jnp.transpose(x, (1, 0, 2))                          # (T, B, D)
    x_tm = jnp.pad(x_tm, ((0, 0), (0, B_pad - B), (0, 0)))      # (T, B_pad, D)
    x2d = x_tm.reshape(T * B_pad, D_in)

    vmem = pl.BlockSpec(memory_space=pltpu.MemorySpace.VMEM)

    out2d = pl.pallas_call(
        functools.partial(gru_fc_kernel, T=T, B_pad=B_pad, H=H),
        out_shape=jax.ShapeDtypeStruct((T * B_pad, OP), jnp.float32),
        in_specs=[vmem] * 7,
        out_specs=vmem,
        scratch_shapes=[pltpu.VMEM((T * B_pad, 3 * HP), jnp.float32),
                        pltpu.VMEM((T * B_pad, HP), jnp.float32)],
        compiler_params=pltpu.CompilerParams(
            vmem_limit_bytes=8 * 1024 * 1024),
    )(x2d, prepared["w_ih"], prepared["w_hh"], prepared["b_ih"],
      prepared["b_hh_n"], prepared["w_fc"], prepared["b_fc"])

    # Slice away row/lane padding, restore batch_first (B, T, O).
    out = out2d.reshape(T, B_pad, OP)[:, :B, :O]
    return jnp.transpose(out, (1, 0, 2))


def init_params(key, input_size, hidden_size, output_size):
    """Deterministic synthetic init matching PyTorch parameter shapes.

    nn.GRU : weight_ih_l0 (3H, D_in), weight_hh_l0 (3H, H), biases (3H,)
             gate order along the 3H axis: r, z, n
    nn.Linear: weight (O, H), bias (O,)
    Stored pre-transposed for right-multiplication inside the kernel.
    """
    k = 1.0 / np.sqrt(hidden_size)
    keys = jax.random.split(key, 6)
    u = lambda kk, shape: jax.random.uniform(kk, shape, jnp.float32, -k, k)
    return {
        "w_ih": u(keys[0], (input_size, 3 * hidden_size)),   # = weight_ih_l0.T
        "w_hh": u(keys[1], (hidden_size, 3 * hidden_size)),  # = weight_hh_l0.T
        "b_ih": u(keys[2], (1, 3 * hidden_size)),
        "b_hh": u(keys[3], (1, 3 * hidden_size)),
        "w_fc": u(keys[4], (hidden_size, output_size)),      # = fc.weight.T
        "b_fc": u(keys[5], (1, output_size)),
    }


def reference_forward_f32(x, params):
    """Pure-f32 JAX reference of the GRU + Linear math (module semantics)."""
    B, T, D = x.shape
    H = params["w_hh"].shape[0]
    h0 = jnp.zeros((B, H), jnp.float32)

    def step(h, x_t):
        gi = x_t @ params["w_ih"] + params["b_ih"]
        gh = h @ params["w_hh"] + params["b_hh"]
        i_r, i_z, i_n = jnp.split(gi, 3, axis=-1)
        h_r, h_z, h_n = jnp.split(gh, 3, axis=-1)
        r = jax.nn.sigmoid(i_r + h_r)
        z = jax.nn.sigmoid(i_z + h_z)
        n = jnp.tanh(i_n + r * h_n)
        h_new = (1.0 - z) * n + z * h
        y = h_new @ params["w_fc"] + params["b_fc"]
        return h_new, y

    _, ys = jax.lax.scan(step, h0, jnp.transpose(x, (1, 0, 2)))
    return jnp.transpose(ys, (1, 0, 2))


def reference_forward_mixed(x, params):
    """Same math with bf16 matmul operands / f32 accumulation (mirrors kernel)."""
    B, T, D = x.shape
    H = params["w_hh"].shape[0]
    bf = jnp.bfloat16
    w_ih = params["w_ih"].astype(bf)
    w_hh = params["w_hh"].astype(bf)
    w_fc = params["w_fc"].astype(bf)
    h0 = jnp.zeros((B, H), jnp.float32)

    def step(h, x_t):
        gi = jnp.dot(x_t.astype(bf), w_ih,
                     preferred_element_type=jnp.float32) + params["b_ih"]
        gh = jnp.dot(h.astype(bf), w_hh,
                     preferred_element_type=jnp.float32) + params["b_hh"]
        i_r, i_z, i_n = jnp.split(gi, 3, axis=-1)
        h_r, h_z, h_n = jnp.split(gh, 3, axis=-1)
        r = jax.nn.sigmoid(i_r + h_r)
        z = jax.nn.sigmoid(i_z + h_z)
        n = jnp.tanh(i_n + r * h_n)
        h_new = (1.0 - z) * n + z * h
        y = jnp.dot(h_new.astype(bf), w_fc,
                    preferred_element_type=jnp.float32) + params["b_fc"]
        return h_new, y

    _, ys = jax.lax.scan(step, h0, jnp.transpose(x, (1, 0, 2)))
    return jnp.transpose(ys, (1, 0, 2))


if __name__ == "__main__":
    # Small shapes consistent with the module.
    B, T = 2, 8
    INPUT_SIZE, HIDDEN_SIZE, OUTPUT_SIZE = 64, 32, 3

    root = jax.random.PRNGKey(0)
    kx, kp = jax.random.split(root)

    x = jax.random.normal(kx, (B, T, INPUT_SIZE), jnp.float32)
    raw_params = init_params(kp, INPUT_SIZE, HIDDEN_SIZE, OUTPUT_SIZE)

    # One-time parameter repacking (out of the per-call path).
    prepared = prepare_params(raw_params, HIDDEN_SIZE, OUTPUT_SIZE)

    fwd = jax.jit(functools.partial(language_detector_forward,
                                    hidden_size=HIDDEN_SIZE,
                                    output_size=OUTPUT_SIZE))
    out = jax.block_until_ready(fwd(x, prepared))
    assert out.shape == (B, T, OUTPUT_SIZE)

    ref_mixed = jax.block_until_ready(reference_forward_mixed(x, raw_params))
    ref_f32 = jax.block_until_ready(reference_forward_f32(x, raw_params))

    # Kernel correctness vs precision-matched reference (tight tolerance).
    np.testing.assert_allclose(np.asarray(out), np.asarray(ref_mixed),
                               rtol=2e-3, atol=2e-3)
    # Semantic sanity vs the pure-f32 module math (bf16 MXU operands only).
    np.testing.assert_allclose(np.asarray(out), np.asarray(ref_f32),
                               rtol=0.0, atol=1e-1)
    print("KERNEL_OK")
</pallas_src>

<mosaic_0001>
module attributes {stable_mosaic.version = 11 : i64} {
  func.func @gru_fc_kernel(%arg0: memref<64x64xf32, #tpu.memory_space<vmem>>, %arg1: memref<64x384xbf16, #tpu.memory_space<vmem>>, %arg2: memref<32x384xbf16, #tpu.memory_space<vmem>>, %arg3: memref<1x384xf32, #tpu.memory_space<vmem>>, %arg4: memref<1x128xf32, #tpu.memory_space<vmem>>, %arg5: memref<32x128xbf16, #tpu.memory_space<vmem>>, %arg6: memref<1x128xf32, #tpu.memory_space<vmem>>, %arg7: memref<64x128xf32, #tpu.memory_space<vmem>>, %arg8: memref<64x384xf32, #tpu.memory_space<vmem>>, %arg9: memref<64x128xf32, #tpu.memory_space<vmem>>) attributes {dimension_semantics = [], scalar_prefetch = 0 : i64, scratch_operands = 2 : i64, tpu.core_type = #tpu.core_type<tc>} {
    %c0 = arith.constant 0 : index
    %c0_0 = arith.constant 0 : index
    %0 = vector.load %arg0[%c0, %c0_0] : memref<64x64xf32, #tpu.memory_space<vmem>>, vector<64x64xf32>
    %1 = arith.truncf %0 : vector<64x64xf32> to vector<64x64xbf16>
    %c0_1 = arith.constant 0 : index
    %c0_2 = arith.constant 0 : index
    %2 = vector.load %arg1[%c0_1, %c0_2] : memref<64x384xbf16, #tpu.memory_space<vmem>>, vector<64x384xbf16>
    %cst = arith.constant dense<0.000000e+00> : vector<64x384xf32>
    %3 = tpu.matmul %1, %2, %cst {dimension_numbers = #tpu.dot_dimension_numbers<[1], [0], [0], [1], [0, 0, 1, 1], [], []>} : vector<64x64xbf16>, vector<64x384xbf16>, vector<64x384xf32> -> vector<64x384xf32>
    %c0_3 = arith.constant 0 : index
    %c0_4 = arith.constant 0 : index
    %4 = vector.load %arg3[%c0_3, %c0_4] : memref<1x384xf32, #tpu.memory_space<vmem>>, vector<1x384xf32>
    %5 = vector.broadcast %4 : vector<1x384xf32> to vector<64x384xf32>
    %6 = arith.addf %3, %5 : vector<64x384xf32>
    %c0_5 = arith.constant 0 : index
    %c0_6 = arith.constant 0 : index
    %7 = vector.load %arg8[%c0_5, %c0_6] : memref<64x384xf32, #tpu.memory_space<vmem>>, vector<64x384xf32>
    tpu.vector_store %arg8[%c0_5, %c0_6], %6 {strides = array<i32>} : memref<64x384xf32, #tpu.memory_space<vmem>>, vector<64x384xf32>,
    %c0_7 = arith.constant 0 : index
    %c0_8 = arith.constant 0 : index
    %8 = vector.load %arg2[%c0_7, %c0_8] : memref<32x384xbf16, #tpu.memory_space<vmem>>, vector<32x384xbf16>
    %c0_9 = arith.constant 0 : index
    %c0_10 = arith.constant 0 : index
    %9 = vector.load %arg4[%c0_9, %c0_10] : memref<1x128xf32, #tpu.memory_space<vmem>>, vector<1x128xf32>
    %10 = vector.shape_cast %9 : vector<1x128xf32> to vector<1x128xf32>
    %11 = vector.broadcast %10 : vector<1x128xf32> to vector<8x128xf32>
    %cst_11 = arith.constant 0.000000e+00 : f32
    %12 = vector.broadcast %cst_11 : f32 to vector<8x128xf32>
    %c0_12 = arith.constant 0 : index
    %c0_13 = arith.constant 0 : index
    %13 = vector.load %arg8[%c0_12, %c0_13] : memref<64x384xf32, #tpu.memory_space<vmem>>, vector<8x384xf32>
    %14 = vector.extract_strided_slice %12 {offsets = [0, 0], sizes = [8, 32], strides = [1, 1]} : vector<8x128xf32> to vector<8x32xf32>
    %15 = arith.truncf %14 : vector<8x32xf32> to vector<8x32xbf16>
    %cst_14 = arith.constant dense<0.000000e+00> : vector<8x384xf32>
    %16 = tpu.matmul %15, %8, %cst_14 {dimension_numbers = #tpu.dot_dimension_numbers<[1], [0], [0], [1], [0, 0, 1, 1], [], []>} : vector<8x32xbf16>, vector<32x384xbf16>, vector<8x384xf32> -> vector<8x384xf32>
    %17 = vector.extract_strided_slice %13 {offsets = [0, 0], sizes = [8, 128], strides = [1, 1]} : vector<8x384xf32> to vector<8x128xf32>
    %18 = vector.extract_strided_slice %16 {offsets = [0, 0], sizes = [8, 128], strides = [1, 1]} : vector<8x384xf32> to vector<8x128xf32>
    %19 = arith.addf %17, %18 : vector<8x128xf32>
    %20 = arith.negf %19 : vector<8x128xf32>
    %21 = math.exp %20 : vector<8x128xf32>
    %cst_15 = arith.constant 1.000000e+00 : f32
    %22 = vector.broadcast %cst_15 : f32 to vector<8x128xf32>
    %23 = arith.addf %22, %21 : vector<8x128xf32>
    %24 = arith.divf %22, %23 : vector<8x128xf32>
    %25 = vector.extract_strided_slice %13 {offsets = [0, 128], sizes = [8, 128], strides = [1, 1]} : vector<8x384xf32> to vector<8x128xf32>
    %26 = vector.extract_strided_slice %16 {offsets = [0, 128], sizes = [8, 128], strides = [1, 1]} : vector<8x384xf32> to vector<8x128xf32>
    %27 = arith.addf %25, %26 : vector<8x128xf32>
    %28 = arith.negf %27 : vector<8x128xf32>
    %29 = math.exp %28 : vector<8x128xf32>
    %cst_16 = arith.constant 1.000000e+00 : f32
    %30 = vector.broadcast %cst_16 : f32 to vector<8x128xf32>
    %31 = arith.addf %30, %29 : vector<8x128xf32>
    %32 = arith.divf %30, %31 : vector<8x128xf32>
    %33 = vector.extract_strided_slice %13 {offsets = [0, 256], sizes = [8, 128], strides = [1, 1]} : vector<8x384xf32> to vector<8x128xf32>
    %34 = vector.extract_strided_slice %16 {offsets = [0, 256], sizes = [8, 128], strides = [1, 1]} : vector<8x384xf32> to vector<8x128xf32>
    %35 = arith.addf %34, %11 : vector<8x128xf32>
    %36 = arith.mulf %24, %35 : vector<8x128xf32>
    %37 = arith.addf %33, %36 : vector<8x128xf32>
    %38 = math.tanh %37 : vector<8x128xf32>
    %cst_17 = arith.constant 1.000000e+00 : f32
    %39 = vector.broadcast %cst_17 : f32 to vector<8x128xf32>
    %40 = arith.subf %39, %32 : vector<8x128xf32>
    %41 = arith.mulf %40, %38 : vector<8x128xf32>
    %42 = arith.mulf %32, %12 : vector<8x128xf32>
    %43 = arith.addf %41, %42 : vector<8x128xf32>
    %c0_18 = arith.constant 0 : index
    %c0_19 = arith.constant 0 : index
    %44 = vector.load %arg9[%c0_18, %c0_19] : memref<64x128xf32, #tpu.memory_space<vmem>>, vector<8x128xf32>
    tpu.vector_store %arg9[%c0_18, %c0_19], %43 {strides = array<i32>} : memref<64x128xf32, #tpu.memory_space<vmem>>, vector<8x128xf32>,
    %c8 = arith.constant 8 : index
    %c0_20 = arith.constant 0 : index
    %45 = vector.load %arg8[%c8, %c0_20] : memref<64x384xf32, #tpu.memory_space<vmem>>, vector<8x384xf32>
    %46 = vector.extract_strided_slice %43 {offsets = [0, 0], sizes = [8, 32], strides = [1, 1]} : vector<8x128xf32> to vector<8x32xf32>
    %47 = arith.truncf %46 : vector<8x32xf32> to vector<8x32xbf16>
    %cst_21 = arith.constant dense<0.000000e+00> : vector<8x384xf32>
    %48 = tpu.matmul %47, %8, %cst_21 {dimension_numbers = #tpu.dot_dimension_numbers<[1], [0], [0], [1], [0, 0, 1, 1], [], []>} : vector<8x32xbf16>, vector<32x384xbf16>, vector<8x384xf32> -> vector<8x384xf32>
    %49 = vector.extract_strided_slice %45 {offsets = [0, 0], sizes = [8, 128], strides = [1, 1]} : vector<8x384xf32> to vector<8x128xf32>
    %50 = vector.extract_strided_slice %48 {offsets = [0, 0], sizes = [8, 128], strides = [1, 1]} : vector<8x384xf32> to vector<8x128xf32>
    %51 = arith.addf %49, %50 : vector<8x128xf32>
    %52 = arith.negf %51 : vector<8x128xf32>
    %53 = math.exp %52 : vector<8x128xf32>
    %cst_22 = arith.constant 1.000000e+00 : f32
    %54 = vector.broadcast %cst_22 : f32 to vector<8x128xf32>
    %55 = arith.addf %54, %53 : vector<8x128xf32>
    %56 = arith.divf %54, %55 : vector<8x128xf32>
    %57 = vector.extract_strided_slice %45 {offsets = [0, 128], sizes = [8, 128], strides = [1, 1]} : vector<8x384xf32> to vector<8x128xf32>
    %58 = vector.extract_strided_slice %48 {offsets = [0, 128], sizes = [8, 128], strides = [1, 1]} : vector<8x384xf32> to vector<8x128xf32>
    %59 = arith.addf %57, %58 : vector<8x128xf32>
    %60 = arith.negf %59 : vector<8x128xf32>
    %61 = math.exp %60 : vector<8x128xf32>
    %cst_23 = arith.constant 1.000000e+00 : f32
    %62 = vector.broadcast %cst_23 : f32 to vector<8x128xf32>
    %63 = arith.addf %62, %61 : vector<8x128xf32>
    %64 = arith.divf %62, %63 : vector<8x128xf32>
    %65 = vector.extract_strided_slice %45 {offsets = [0, 256], sizes = [8, 128], strides = [1, 1]} : vector<8x384xf32> to vector<8x128xf32>
    %66 = vector.extract_strided_slice %48 {offsets = [0, 256], sizes = [8, 128], strides = [1, 1]} : vector<8x384xf32> to vector<8x128xf32>
    %67 = arith.addf %66, %11 : vector<8x128xf32>
    %68 = arith.mulf %56, %67 : vector<8x128xf32>
    %69 = arith.addf %65, %68 : vector<8x128xf32>
    %70 = math.tanh %69 : vector<8x128xf32>
    %cst_24 = arith.constant 1.000000e+00 : f32
    %71 = vector.broadcast %cst_24 : f32 to vector<8x128xf32>
    %72 = arith.subf %71, %64 : vector<8x128xf32>
    %73 = arith.mulf %72, %70 : vector<8x128xf32>
    %74 = arith.mulf %64, %43 : vector<8x128xf32>
    %75 = arith.addf %73, %74 : vector<8x128xf32>
    %c8_25 = arith.constant 8 : index
    %c0_26 = arith.constant 0 : index
    %76 = vector.load %arg9[%c8_25, %c0_26] : memref<64x128xf32, #tpu.memory_space<vmem>>, vector<8x128xf32>
    tpu.vector_store %arg9[%c8_25, %c0_26], %75 {strides = array<i32>} : memref<64x128xf32, #tpu.memory_space<vmem>>, vector<8x128xf32>,
    %c16 = arith.constant 16 : index
    %c0_27 = arith.constant 0 : index
    %77 = vector.load %arg8[%c16, %c0_27] : memref<64x384xf32, #tpu.memory_space<vmem>>, vector<8x384xf32>
    %78 = vector.extract_strided_slice %75 {offsets = [0, 0], sizes = [8, 32], strides = [1, 1]} : vector<8x128xf32> to vector<8x32xf32>
    %79 = arith.truncf %78 : vector<8x32xf32> to vector<8x32xbf16>
    %cst_28 = arith.constant dense<0.000000e+00> : vector<8x384xf32>
    %80 = tpu.matmul %79, %8, %cst_28 {dimension_numbers = #tpu.dot_dimension_numbers<[1], [0], [0], [1], [0, 0, 1, 1], [], []>} : vector<8x32xbf16>, vector<32x384xbf16>, vector<8x384xf32> -> vector<8x384xf32>
    %81 = vector.extract_strided_slice %77 {offsets = [0, 0], sizes = [8, 128], strides = [1, 1]} : vector<8x384xf32> to vector<8x128xf32>
    %82 = vector.extract_strided_slice %80 {offsets = [0, 0], sizes = [8, 128], strides = [1, 1]} : vector<8x384xf32> to vector<8x128xf32>
    %83 = arith.addf %81, %82 : vector<8x128xf32>
    %84 = arith.negf %83 : vector<8x128xf32>
    %85 = math.exp %84 : vector<8x128xf32>
    %cst_29 = arith.constant 1.000000e+00 : f32
    %86 = vector.broadcast %cst_29 : f32 to vector<8x128xf32>
    %87 = arith.addf %86, %85 : vector<8x128xf32>
    %88 = arith.divf %86, %87 : vector<8x128xf32>
    %89 = vector.extract_strided_slice %77 {offsets = [0, 128], sizes = [8, 128], strides = [1, 1]} : vector<8x384xf32> to vector<8x128xf32>
    %90 = vector.extract_strided_slice %80 {offsets = [0, 128], sizes = [8, 128], strides = [1, 1]} : vector<8x384xf32> to vector<8x128xf32>
    %91 = arith.addf %89, %90 : vector<8x128xf32>
    %92 = arith.negf %91 : vector<8x128xf32>
    %93 = math.exp %92 : vector<8x128xf32>
    %cst_30 = arith.constant 1.000000e+00 : f32
    %94 = vector.broadcast %cst_30 : f32 to vector<8x128xf32>
    %95 = arith.addf %94, %93 : vector<8x128xf32>
    %96 = arith.divf %94, %95 : vector<8x128xf32>
    %97 = vector.extract_strided_slice %77 {offsets = [0, 256], sizes = [8, 128], strides = [1, 1]} : vector<8x384xf32> to vector<8x128xf32>
    %98 = vector.extract_strided_slice %80 {offsets = [0, 256], sizes = [8, 128], strides = [1, 1]} : vector<8x384xf32> to vector<8x128xf32>
    %99 = arith.addf %98, %11 : vector<8x128xf32>
    %100 = arith.mulf %88, %99 : vector<8x128xf32>
    %101 = arith.addf %97, %100 : vector<8x128xf32>
    %102 = math.tanh %101 : vector<8x128xf32>
    %cst_31 = arith.constant 1.000000e+00 : f32
    %103 = vector.broadcast %cst_31 : f32 to vector<8x128xf32>
    %104 = arith.subf %103, %96 : vector<8x128xf32>
    %105 = arith.mulf %104, %102 : vector<8x128xf32>
    %106 = arith.mulf %96, %75 : vector<8x128xf32>
    %107 = arith.addf %105, %106 : vector<8x128xf32>
    %c16_32 = arith.constant 16 : index
    %c0_33 = arith.constant 0 : index
    %108 = vector.load %arg9[%c16_32, %c0_33] : memref<64x128xf32, #tpu.memory_space<vmem>>, vector<8x128xf32>
    tpu.vector_store %arg9[%c16_32, %c0_33], %107 {strides = array<i32>} : memref<64x128xf32, #tpu.memory_space<vmem>>, vector<8x128xf32>,
    %c24 = arith.constant 24 : index
    %c0_34 = arith.constant 0 : index
    %109 = vector.load %arg8[%c24, %c0_34] : memref<64x384xf32, #tpu.memory_space<vmem>>, vector<8x384xf32>
    %110 = vector.extract_strided_slice %107 {offsets = [0, 0], sizes = [8, 32], strides = [1, 1]} : vector<8x128xf32> to vector<8x32xf32>
    %111 = arith.truncf %110 : vector<8x32xf32> to vector<8x32xbf16>
    %cst_35 = arith.constant dense<0.000000e+00> : vector<8x384xf32>
    %112 = tpu.matmul %111, %8, %cst_35 {dimension_numbers = #tpu.dot_dimension_numbers<[1], [0], [0], [1], [0, 0, 1, 1], [], []>} : vector<8x32xbf16>, vector<32x384xbf16>, vector<8x384xf32> -> vector<8x384xf32>
    %113 = vector.extract_strided_slice %109 {offsets = [0, 0], sizes = [8, 128], strides = [1, 1]} : vector<8x384xf32> to vector<8x128xf32>
    %114 = vector.extract_strided_slice %112 {offsets = [0, 0], sizes = [8, 128], strides = [1, 1]} : vector<8x384xf32> to vector<8x128xf32>
    %115 = arith.addf %113, %114 : vector<8x128xf32>
    %116 = arith.negf %115 : vector<8x128xf32>
    %117 = math.exp %116 : vector<8x128xf32>
    %cst_36 = arith.constant 1.000000e+00 : f32
    %118 = vector.broadcast %cst_36 : f32 to vector<8x128xf32>
    %119 = arith.addf %118, %117 : vector<8x128xf32>
    %120 = arith.divf %118, %119 : vector<8x128xf32>
    %121 = vector.extract_strided_slice %109 {offsets = [0, 128], sizes = [8, 128], strides = [1, 1]} : vector<8x384xf32> to vector<8x128xf32>
    %122 = vector.extract_strided_slice %112 {offsets = [0, 128], sizes = [8, 128], strides = [1, 1]} : vector<8x384xf32> to vector<8x128xf32>
    %123 = arith.addf %121, %122 : vector<8x128xf32>
    %124 = arith.negf %123 : vector<8x128xf32>
    %125 = math.exp %124 : vector<8x128xf32>
    %cst_37 = arith.constant 1.000000e+00 : f32
    %126 = vector.broadcast %cst_37 : f32 to vector<8x128xf32>
    %127 = arith.addf %126, %125 : vector<8x128xf32>
    %128 = arith.divf %126, %127 : vector<8x128xf32>
    %129 = vector.extract_strided_slice %109 {offsets = [0, 256], sizes = [8, 128], strides = [1, 1]} : vector<8x384xf32> to vector<8x128xf32>
    %130 = vector.extract_strided_slice %112 {offsets = [0, 256], sizes = [8, 128], strides = [1, 1]} : vector<8x384xf32> to vector<8x128xf32>
    %131 = arith.addf %130, %11 : vector<8x128xf32>
    %132 = arith.mulf %120, %131 : vector<8x128xf32>
    %133 = arith.addf %129, %132 : vector<8x128xf32>
    %134 = math.tanh %133 : vector<8x128xf32>
    %cst_38 = arith.constant 1.000000e+00 : f32
    %135 = vector.broadcast %cst_38 : f32 to vector<8x128xf32>
    %136 = arith.subf %135, %128 : vector<8x128xf32>
    %137 = arith.mulf %136, %134 : vector<8x128xf32>
    %138 = arith.mulf %128, %107 : vector<8x128xf32>
    %139 = arith.addf %137, %138 : vector<8x128xf32>
    %c24_39 = arith.constant 24 : index
    %c0_40 = arith.constant 0 : index
    %140 = vector.load %arg9[%c24_39, %c0_40] : memref<64x128xf32, #tpu.memory_space<vmem>>, vector<8x128xf32>
    tpu.vector_store %arg9[%c24_39, %c0_40], %139 {strides = array<i32>} : memref<64x128xf32, #tpu.memory_space<vmem>>, vector<8x128xf32>,
    %c32 = arith.constant 32 : index
    %c0_41 = arith.constant 0 : index
    %141 = vector.load %arg8[%c32, %c0_41] : memref<64x384xf32, #tpu.memory_space<vmem>>, vector<8x384xf32>
    %142 = vector.extract_strided_slice %139 {offsets = [0, 0], sizes = [8, 32], strides = [1, 1]} : vector<8x128xf32> to vector<8x32xf32>
    %143 = arith.truncf %142 : vector<8x32xf32> to vector<8x32xbf16>
    %cst_42 = arith.constant dense<0.000000e+00> : vector<8x384xf32>
    %144 = tpu.matmul %143, %8, %cst_42 {dimension_numbers = #tpu.dot_dimension_numbers<[1], [0], [0], [1], [0, 0, 1, 1], [], []>} : vector<8x32xbf16>, vector<32x384xbf16>, vector<8x384xf32> -> vector<8x384xf32>
    %145 = vector.extract_strided_slice %141 {offsets = [0, 0], sizes = [8, 128], strides = [1, 1]} : vector<8x384xf32> to vector<8x128xf32>
    %146 = vector.extract_strided_slice %144 {offsets = [0, 0], sizes = [8, 128], strides = [1, 1]} : vector<8x384xf32> to vector<8x128xf32>
    %147 = arith.addf %145, %146 : vector<8x128xf32>
    %148 = arith.negf %147 : vector<8x128xf32>
    %149 = math.exp %148 : vector<8x128xf32>
    %cst_43 = arith.constant 1.000000e+00 : f32
    %150 = vector.broadcast %cst_43 : f32 to vector<8x128xf32>
    %151 = arith.addf %150, %149 : vector<8x128xf32>
    %152 = arith.divf %150, %151 : vector<8x128xf32>
    %153 = vector.extract_strided_slice %141 {offsets = [0, 128], sizes = [8, 128], strides = [1, 1]} : vector<8x384xf32> to vector<8x128xf32>
    %154 = vector.extract_strided_slice %144 {offsets = [0, 128], sizes = [8, 128], strides = [1, 1]} : vector<8x384xf32> to vector<8x128xf32>
    %155 = arith.addf %153, %154 : vector<8x128xf32>
    %156 = arith.negf %155 : vector<8x128xf32>
    %157 = math.exp %156 : vector<8x128xf32>
    %cst_44 = arith.constant 1.000000e+00 : f32
    %158 = vector.broadcast %cst_44 : f32 to vector<8x128xf32>
    %159 = arith.addf %158, %157 : vector<8x128xf32>
    %160 = arith.divf %158, %159 : vector<8x128xf32>
    %161 = vector.extract_strided_slice %141 {offsets = [0, 256], sizes = [8, 128], strides = [1, 1]} : vector<8x384xf32> to vector<8x128xf32>
    %162 = vector.extract_strided_slice %144 {offsets = [0, 256], sizes = [8, 128], strides = [1, 1]} : vector<8x384xf32> to vector<8x128xf32>
    %163 = arith.addf %162, %11 : vector<8x128xf32>
    %164 = arith.mulf %152, %163 : vector<8x128xf32>
    %165 = arith.addf %161, %164 : vector<8x128xf32>
    %166 = math.tanh %165 : vector<8x128xf32>
    %cst_45 = arith.constant 1.000000e+00 : f32
    %167 = vector.broadcast %cst_45 : f32 to vector<8x128xf32>
    %168 = arith.subf %167, %160 : vector<8x128xf32>
    %169 = arith.mulf %168, %166 : vector<8x128xf32>
    %170 = arith.mulf %160, %139 : vector<8x128xf32>
    %171 = arith.addf %169, %170 : vector<8x128xf32>
    %c32_46 = arith.constant 32 : index
    %c0_47 = arith.constant 0 : index
    %172 = vector.load %arg9[%c32_46, %c0_47] : memref<64x128xf32, #tpu.memory_space<vmem>>, vector<8x128xf32>
    tpu.vector_store %arg9[%c32_46, %c0_47], %171 {strides = array<i32>} : memref<64x128xf32, #tpu.memory_space<vmem>>, vector<8x128xf32>,
    %c40 = arith.constant 40 : index
    %c0_48 = arith.constant 0 : index
    %173 = vector.load %arg8[%c40, %c0_48] : memref<64x384xf32, #tpu.memory_space<vmem>>, vector<8x384xf32>
    %174 = vector.extract_strided_slice %171 {offsets = [0, 0], sizes = [8, 32], strides = [1, 1]} : vector<8x128xf32> to vector<8x32xf32>
    %175 = arith.truncf %174 : vector<8x32xf32> to vector<8x32xbf16>
    %cst_49 = arith.constant dense<0.000000e+00> : vector<8x384xf32>
    %176 = tpu.matmul %175, %8, %cst_49 {dimension_numbers = #tpu.dot_dimension_numbers<[1], [0], [0], [1], [0, 0, 1, 1], [], []>} : vector<8x32xbf16>, vector<32x384xbf16>, vector<8x384xf32> -> vector<8x384xf32>
    %177 = vector.extract_strided_slice %173 {offsets = [0, 0], sizes = [8, 128], strides = [1, 1]} : vector<8x384xf32> to vector<8x128xf32>
    %178 = vector.extract_strided_slice %176 {offsets = [0, 0], sizes = [8, 128], strides = [1, 1]} : vector<8x384xf32> to vector<8x128xf32>
    %179 = arith.addf %177, %178 : vector<8x128xf32>
    %180 = arith.negf %179 : vector<8x128xf32>
    %181 = math.exp %180 : vector<8x128xf32>
    %cst_50 = arith.constant 1.000000e+00 : f32
    %182 = vector.broadcast %cst_50 : f32 to vector<8x128xf32>
    %183 = arith.addf %182, %181 : vector<8x128xf32>
    %184 = arith.divf %182, %183 : vector<8x128xf32>
    %185 = vector.extract_strided_slice %173 {offsets = [0, 128], sizes = [8, 128], strides = [1, 1]} : vector<8x384xf32> to vector<8x128xf32>
    %186 = vector.extract_strided_slice %176 {offsets = [0, 128], sizes = [8, 128], strides = [1, 1]} : vector<8x384xf32> to vector<8x128xf32>
    %187 = arith.addf %185, %186 : vector<8x128xf32>
    %188 = arith.negf %187 : vector<8x128xf32>
    %189 = math.exp %188 : vector<8x128xf32>
    %cst_51 = arith.constant 1.000000e+00 : f32
    %190 = vector.broadcast %cst_51 : f32 to vector<8x128xf32>
    %191 = arith.addf %190, %189 : vector<8x128xf32>
    %192 = arith.divf %190, %191 : vector<8x128xf32>
    %193 = vector.extract_strided_slice %173 {offsets = [0, 256], sizes = [8, 128], strides = [1, 1]} : vector<8x384xf32> to vector<8x128xf32>
    %194 = vector.extract_strided_slice %176 {offsets = [0, 256], sizes = [8, 128], strides = [1, 1]} : vector<8x384xf32> to vector<8x128xf32>
    %195 = arith.addf %194, %11 : vector<8x128xf32>
    %196 = arith.mulf %184, %195 : vector<8x128xf32>
    %197 = arith.addf %193, %196 : vector<8x128xf32>
    %198 = math.tanh %197 : vector<8x128xf32>
    %cst_52 = arith.constant 1.000000e+00 : f32
    %199 = vector.broadcast %cst_52 : f32 to vector<8x128xf32>
    %200 = arith.subf %199, %192 : vector<8x128xf32>
    %201 = arith.mulf %200, %198 : vector<8x128xf32>
    %202 = arith.mulf %192, %171 : vector<8x128xf32>
    %203 = arith.addf %201, %202 : vector<8x128xf32>
    %c40_53 = arith.constant 40 : index
    %c0_54 = arith.constant 0 : index
    %204 = vector.load %arg9[%c40_53, %c0_54] : memref<64x128xf32, #tpu.memory_space<vmem>>, vector<8x128xf32>
    tpu.vector_store %arg9[%c40_53, %c0_54], %203 {strides = array<i32>} : memref<64x128xf32, #tpu.memory_space<vmem>>, vector<8x128xf32>,
    %c48 = arith.constant 48 : index
    %c0_55 = arith.constant 0 : index
    %205 = vector.load %arg8[%c48, %c0_55] : memref<64x384xf32, #tpu.memory_space<vmem>>, vector<8x384xf32>
    %206 = vector.extract_strided_slice %203 {offsets = [0, 0], sizes = [8, 32], strides = [1, 1]} : vector<8x128xf32> to vector<8x32xf32>
    %207 = arith.truncf %206 : vector<8x32xf32> to vector<8x32xbf16>
    %cst_56 = arith.constant dense<0.000000e+00> : vector<8x384xf32>
    %208 = tpu.matmul %207, %8, %cst_56 {dimension_numbers = #tpu.dot_dimension_numbers<[1], [0], [0], [1], [0, 0, 1, 1], [], []>} : vector<8x32xbf16>, vector<32x384xbf16>, vector<8x384xf32> -> vector<8x384xf32>
    %209 = vector.extract_strided_slice %205 {offsets = [0, 0], sizes = [8, 128], strides = [1, 1]} : vector<8x384xf32> to vector<8x128xf32>
    %210 = vector.extract_strided_slice %208 {offsets = [0, 0], sizes = [8, 128], strides = [1, 1]} : vector<8x384xf32> to vector<8x128xf32>
    %211 = arith.addf %209, %210 : vector<8x128xf32>
    %212 = arith.negf %211 : vector<8x128xf32>
    %213 = math.exp %212 : vector<8x128xf32>
    %cst_57 = arith.constant 1.000000e+00 : f32
    %214 = vector.broadcast %cst_57 : f32 to vector<8x128xf32>
    %215 = arith.addf %214, %213 : vector<8x128xf32>
    %216 = arith.divf %214, %215 : vector<8x128xf32>
    %217 = vector.extract_strided_slice %205 {offsets = [0, 128], sizes = [8, 128], strides = [1, 1]} : vector<8x384xf32> to vector<8x128xf32>
    %218 = vector.extract_strided_slice %208 {offsets = [0, 128], sizes = [8, 128], strides = [1, 1]} : vector<8x384xf32> to vector<8x128xf32>
    %219 = arith.addf %217, %218 : vector<8x128xf32>
    %220 = arith.negf %219 : vector<8x128xf32>
    %221 = math.exp %220 : vector<8x128xf32>
    %cst_58 = arith.constant 1.000000e+00 : f32
    %222 = vector.broadcast %cst_58 : f32 to vector<8x128xf32>
    %223 = arith.addf %222, %221 : vector<8x128xf32>
    %224 = arith.divf %222, %223 : vector<8x128xf32>
    %225 = vector.extract_strided_slice %205 {offsets = [0, 256], sizes = [8, 128], strides = [1, 1]} : vector<8x384xf32> to vector<8x128xf32>
    %226 = vector.extract_strided_slice %208 {offsets = [0, 256], sizes = [8, 128], strides = [1, 1]} : vector<8x384xf32> to vector<8x128xf32>
    %227 = arith.addf %226, %11 : vector<8x128xf32>
    %228 = arith.mulf %216, %227 : vector<8x128xf32>
    %229 = arith.addf %225, %228 : vector<8x128xf32>
    %230 = math.tanh %229 : vector<8x128xf32>
    %cst_59 = arith.constant 1.000000e+00 : f32
    %231 = vector.broadcast %cst_59 : f32 to vector<8x128xf32>
    %232 = arith.subf %231, %224 : vector<8x128xf32>
    %233 = arith.mulf %232, %230 : vector<8x128xf32>
    %234 = arith.mulf %224, %203 : vector<8x128xf32>
    %235 = arith.addf %233, %234 : vector<8x128xf32>
    %c48_60 = arith.constant 48 : index
    %c0_61 = arith.constant 0 : index
    %236 = vector.load %arg9[%c48_60, %c0_61] : memref<64x128xf32, #tpu.memory_space<vmem>>, vector<8x128xf32>
    tpu.vector_store %arg9[%c48_60, %c0_61], %235 {strides = array<i32>} : memref<64x128xf32, #tpu.memory_space<vmem>>, vector<8x128xf32>,
    %c56 = arith.constant 56 : index
    %c0_62 = arith.constant 0 : index
    %237 = vector.load %arg8[%c56, %c0_62] : memref<64x384xf32, #tpu.memory_space<vmem>>, vector<8x384xf32>
    %238 = vector.extract_strided_slice %235 {offsets = [0, 0], sizes = [8, 32], strides = [1, 1]} : vector<8x128xf32> to vector<8x32xf32>
    %239 = arith.truncf %238 : vector<8x32xf32> to vector<8x32xbf16>
    %cst_63 = arith.constant dense<0.000000e+00> : vector<8x384xf32>
    %240 = tpu.matmul %239, %8, %cst_63 {dimension_numbers = #tpu.dot_dimension_numbers<[1], [0], [0], [1], [0, 0, 1, 1], [], []>} : vector<8x32xbf16>, vector<32x384xbf16>, vector<8x384xf32> -> vector<8x384xf32>
    %241 = vector.extract_strided_slice %237 {offsets = [0, 0], sizes = [8, 128], strides = [1, 1]} : vector<8x384xf32> to vector<8x128xf32>
    %242 = vector.extract_strided_slice %240 {offsets = [0, 0], sizes = [8, 128], strides = [1, 1]} : vector<8x384xf32> to vector<8x128xf32>
    %243 = arith.addf %241, %242 : vector<8x128xf32>
    %244 = arith.negf %243 : vector<8x128xf32>
    %245 = math.exp %244 : vector<8x128xf32>
    %cst_64 = arith.constant 1.000000e+00 : f32
    %246 = vector.broadcast %cst_64 : f32 to vector<8x128xf32>
    %247 = arith.addf %246, %245 : vector<8x128xf32>
    %248 = arith.divf %246, %247 : vector<8x128xf32>
    %249 = vector.extract_strided_slice %237 {offsets = [0, 128], sizes = [8, 128], strides = [1, 1]} : vector<8x384xf32> to vector<8x128xf32>
    %250 = vector.extract_strided_slice %240 {offsets = [0, 128], sizes = [8, 128], strides = [1, 1]} : vector<8x384xf32> to vector<8x128xf32>
    %251 = arith.addf %249, %250 : vector<8x128xf32>
    %252 = arith.negf %251 : vector<8x128xf32>
    %253 = math.exp %252 : vector<8x128xf32>
    %cst_65 = arith.constant 1.000000e+00 : f32
    %254 = vector.broadcast %cst_65 : f32 to vector<8x128xf32>
    %255 = arith.addf %254, %253 : vector<8x128xf32>
    %256 = arith.divf %254, %255 : vector<8x128xf32>
    %257 = vector.extract_strided_slice %237 {offsets = [0, 256], sizes = [8, 128], strides = [1, 1]} : vector<8x384xf32> to vector<8x128xf32>
    %258 = vector.extract_strided_slice %240 {offsets = [0, 256], sizes = [8, 128], strides = [1, 1]} : vector<8x384xf32> to vector<8x128xf32>
    %259 = arith.addf %258, %11 : vector<8x128xf32>
    %260 = arith.mulf %248, %259 : vector<8x128xf32>
    %261 = arith.addf %257, %260 : vector<8x128xf32>
    %262 = math.tanh %261 : vector<8x128xf32>
    %cst_66 = arith.constant 1.000000e+00 : f32
    %263 = vector.broadcast %cst_66 : f32 to vector<8x128xf32>
    %264 = arith.subf %263, %256 : vector<8x128xf32>
    %265 = arith.mulf %264, %262 : vector<8x128xf32>
    %266 = arith.mulf %256, %235 : vector<8x128xf32>
    %267 = arith.addf %265, %266 : vector<8x128xf32>
    %c56_67 = arith.constant 56 : index
    %c0_68 = arith.constant 0 : index
    %268 = vector.load %arg9[%c56_67, %c0_68] : memref<64x128xf32, #tpu.memory_space<vmem>>, vector<8x128xf32>
    tpu.vector_store %arg9[%c56_67, %c0_68], %267 {strides = array<i32>} : memref<64x128xf32, #tpu.memory_space<vmem>>, vector<8x128xf32>,
    %c0_69 = arith.constant 0 : index
    %c0_70 = arith.constant 0 : index
    %269 = vector.load %arg9[%c0_69, %c0_70] : memref<64x128xf32, #tpu.memory_space<vmem>>, vector<64x32xf32>
    %270 = arith.truncf %269 : vector<64x32xf32> to vector<64x32xbf16>
    %c0_71 = arith.constant 0 : index
    %c0_72 = arith.constant 0 : index
    %271 = vector.load %arg5[%c0_71, %c0_72] : memref<32x128xbf16, #tpu.memory_space<vmem>>, vector<32x128xbf16>
    %cst_73 = arith.constant dense<0.000000e+00> : vector<64x128xf32>
    %272 = tpu.matmul %270, %271, %cst_73 {dimension_numbers = #tpu.dot_dimension_numbers<[1], [0], [0], [1], [0, 0, 1, 1], [], []>} : vector<64x32xbf16>, vector<32x128xbf16>, vector<64x128xf32> -> vector<64x128xf32>
    %c0_74 = arith.constant 0 : index
    %c0_75 = arith.constant 0 : index
    %273 = vector.load %arg6[%c0_74, %c0_75] : memref<1x128xf32, #tpu.memory_space<vmem>>, vector<1x128xf32>
    %274 = vector.broadcast %273 : vector<1x128xf32> to vector<64x128xf32>
    %275 = arith.addf %272, %274 : vector<64x128xf32>
    %c0_76 = arith.constant 0 : index
    %c0_77 = arith.constant 0 : index
    %276 = vector.load %arg7[%c0_76, %c0_77] : memref<64x128xf32, #tpu.memory_space<vmem>>, vector<64x128xf32>
    tpu.vector_store %arg7[%c0_76, %c0_77], %275 {strides = array<i32>} : memref<64x128xf32, #tpu.memory_space<vmem>>, vector<64x128xf32>,
    return
  }
}

</mosaic_0001>

<llo_original>
// kernel: language_detector_forward.1
$region0: #{language_detector_forward.1}
  #allocation0 [shape = 'u32[]', space=smem, size = 0x4, offset = 0x4, fixed_abs, tag = 'smem constant byte address 0x4 - core index']
  #allocation1 [shape = 'u32[144,128]{1,0:T(1,128)}', space=vmem, size = 0x12000, scoped, tag = 'internal scratch']
  #allocation2 [shape = 'f32[64,384]{1,0:T(8,128)}', space=vmem, size = 0x18000, scoped, tag = 'scratch operand']
  #allocation3 [shape = 'f32[64,128]{1,0:T(8,128)}', space=vmem, size = 0x8000, scoped, tag = 'scratch operand']
  %s0 = inlined_call_operand.vmem [shape: f32[64,64], index: 0, kind: input, shape index: {}]
  %s1 = inlined_call_operand.vmem [shape: bf16[64,384], index: 1, kind: input, shape index: {}]
  %s2 = inlined_call_operand.hbm [shape: bf16[32,384], index: 2, kind: input, shape index: {}]
  %s3 = inlined_call_operand.vmem [shape: f32[1,384], index: 3, kind: input, shape index: {}]
  %s4 = inlined_call_operand.vmem [shape: f32[1,128], index: 4, kind: input, shape index: {}]
  %s5 = inlined_call_operand.vmem [shape: bf16[32,128], index: 5, kind: input, shape index: {}]
  %s6 = inlined_call_operand.vmem [shape: f32[1,128], index: 6, kind: input, shape index: {}]
  %s7 = inlined_call_operand.vmem [shape: f32[64,128], index: 7, kind: output, shape index: {}]
  %s8 = sld [smem:[#allocation0]]
  $region42: #{language_detector_forward.1} parent=0
    _
  %s10 = ssub.s32 1, %s8
  %s11 = scalar_select 0, %s10, %s8
  $region1: #{language_detector_forward.1} parent=0
    #allocation4 [shape = 'u8[24576]{0}', space=vmem, size = 0x6000, scoped, tag = 'input window, operand 2, single buffered']
    #allocation5 [shape = 's32[1]{0}', space=sflag, size = 0x4, scoped, tag = 'scoped memory for language_detector_forward.1']
    %12 = vsyncpa [#allocation5], 0
    // Predicated region
    $region2: #{language_detector_forward.1} parent=1 // pred_check
      _
    $region3: #{language_detector_forward.1} parent=1 // pred_check_branch
      %14 = sbr.rel (0) target = $region5
    $region4: #{language_detector_forward.1} parent=1 // pred_region
      _
    $region5: #{language_detector_forward.1} parent=1 // pred_fallthru
      _
    // Predicated region
    $region6: #{language_detector_forward.1} parent=1 // pred_check
      _
    $region7: #{language_detector_forward.1} parent=1 // pred_check_branch
      %16 = sbr.rel (0) target = $region9
    $region8: #{language_detector_forward.1} parent=1 // pred_region
      _
    $region9: #{language_detector_forward.1} parent=1 // pred_fallthru
      _
    // Predicated region
    $region10: #{language_detector_forward.1} parent=1 // pred_check
      _
    $region11: #{language_detector_forward.1} parent=1 // pred_check_branch
      %18 = sbr.rel (0) target = $region13
    $region12: #{language_detector_forward.1} parent=1 // pred_region
      %s20 = ssub.s32 768, 768
      %21 = vsyncadd [#allocation5], %s20
      %s22 = sshll.u32 [#allocation4], 4
      %s23 = int_to_ptr.vmem [resolvable:$true] %s22
      %28 = dma.hbm_to_vmem [thread:$0]  %s2, 768, %s23, [#allocation5], 192, 192, 12
    $region13: #{language_detector_forward.1} parent=1 // pred_fallthru
      _
    // Predicated region
    $region14: #{language_detector_forward.1} parent=1 // pred_check
      _
    $region15: #{language_detector_forward.1} parent=1 // pred_check_branch
      %30 = sbr.rel (0) target = $region17
    $region16: #{language_detector_forward.1} parent=1 // pred_region
      _
    $region17: #{language_detector_forward.1} parent=1 // pred_fallthru
      _
    // Predicated region
    $region18: #{language_detector_forward.1} parent=1 // pred_check
      _
    $region19: #{language_detector_forward.1} parent=1 // pred_check_branch
      %32 = sbr.rel (0) target = $region21
    $region20: #{language_detector_forward.1} parent=1 // pred_region
      _
    $region21: #{language_detector_forward.1} parent=1 // pred_fallthru
      _
    // Predicated region
    $region22: #{language_detector_forward.1} parent=1 // pred_check
      _
    $region23: #{language_detector_forward.1} parent=1 // pred_check_branch
      %34 = sbr.rel (0) target = $region25
    $region24: #{language_detector_forward.1} parent=1 // pred_region
      _
    $region25: #{language_detector_forward.1} parent=1 // pred_fallthru
      _
    // Predicated region
    $region26: #{language_detector_forward.1} parent=1 // pred_check
      _
    $region27: #{language_detector_forward.1} parent=1 // pred_check_branch
      %36 = sbr.rel (0) target = $region29
    $region28: #{language_detector_forward.1} parent=1 // pred_region
      _
    $region29: #{language_detector_forward.1} parent=1 // pred_fallthru
      _
    // Predicated region
    $region30: #{language_detector_forward.1} parent=1 // pred_check
      _
    $region31: #{language_detector_forward.1} parent=1 // pred_check_branch
      %38 = sbr.rel (0) target = $region33
    $region32: #{language_detector_forward.1} parent=1 // pred_region
      %39 = dma.done [#allocation5], 768
    $region33: #{language_detector_forward.1} parent=1 // pred_fallthru
      _
    %v41 = vld [vmem:[%s0] sm:$0xff]
    %v42 = vld [vmem:[%s0 + $0x8] sm:$0xff]
    %v43 = vld [vmem:[%s0 + $0x10] sm:$0xff]
    %v44 = vld [vmem:[%s0 + $0x18] sm:$0xff]
    %v45 = vld [vmem:[%s0 + $0x20] sm:$0xff]
    %v46 = vld [vmem:[%s0 + $0x28] sm:$0xff]
    %v47 = vld [vmem:[%s0 + $0x30] sm:$0xff]
    %v48 = vld [vmem:[%s0 + $0x38] sm:$0xff]
    %v49 = vpack.c.bf16 %v42, %v41
    %v50 = vpack.c.bf16 %v44, %v43
    %v51 = vpack.c.bf16 %v46, %v45
    %v52 = vpack.c.bf16 %v48, %v47
    %v53 = vld [vmem:[%s1] sm:$0xff]
    %v54 = vld [vmem:[%s1 + $0x8] sm:$0xf]
    %v55 = vld [vmem:[%s1 + $0xc] sm:$0xff]
    %v56 = vld [vmem:[%s1 + $0x14] sm:$0xf]
    %v57 = vld [vmem:[%s1 + $0x18] sm:$0xff]
    %v58 = vld [vmem:[%s1 + $0x20] sm:$0xf]
    %v59 = vld [vmem:[%s1 + $0x24] sm:$0xff]
    %v60 = vld [vmem:[%s1 + $0x2c] sm:$0xf]
    %v61 = vld [vmem:[%s1 + $0x30] sm:$0xff]
    %v62 = vld [vmem:[%s1 + $0x38] sm:$0xf]
    %v63 = vld [vmem:[%s1 + $0x3c] sm:$0xff]
    %v64 = vld [vmem:[%s1 + $0x44] sm:$0xf]
    %v65 = vld [vmem:[%s1 + $0x48] sm:$0xff]
    %v66 = vld [vmem:[%s1 + $0x50] sm:$0xf]
    %v67 = vld [vmem:[%s1 + $0x54] sm:$0xff]
    %v68 = vld [vmem:[%s1 + $0x5c] sm:$0xf]
    %v69 = vld [vmem:[%s3] sm:$0x7]
    %v71 = vlaneseq
    %v72 = vshrl.u32 %v71, 7
    %v73 = vsub.s32 0, %v72
    %v74 = vrot.slane %v69, %v73
    %v75 = vlaneseq
    %v76 = vshrl.u32 %v75, 7
    %v77 = vsub.s32 1, %v76
    %v78 = vrot.slane %v69, %v77
    %v79 = vlaneseq
    %v80 = vshrl.u32 %v79, 7
    %v81 = vsub.s32 2, %v80
    %v82 = vrot.slane %v69, %v81
    %v102 = vunpack.c.l.b16 %v53
    %v103 = vunpack.c.h.b16 %v53
    %v104 = vunpack.c.l.b16 %v54
    %v105 = vunpack.c.l.b16 %v55
    %v106 = vunpack.c.h.b16 %v55
    %v107 = vunpack.c.l.b16 %v56
    %v108 = vunpack.c.l.b16 %v57
    %v109 = vunpack.c.h.b16 %v57
    %v110 = vunpack.c.l.b16 %v58
    %v111 = vunpack.c.l.b16 %v59
    %v112 = vunpack.c.h.b16 %v59
    %v113 = vunpack.c.l.b16 %v60
    %v114 = vunpack.c.l.b16 %v61
    %v115 = vunpack.c.h.b16 %v61
    %v116 = vunpack.c.l.b16 %v62
    %v117 = vunpack.c.l.b16 %v63
    %v118 = vunpack.c.h.b16 %v63
    %v119 = vunpack.c.l.b16 %v64
    %v120 = vunpack.c.l.b16 %v65
    %v121 = vunpack.c.h.b16 %v65
    %v122 = vunpack.c.l.b16 %v66
    %v123 = vunpack.c.l.b16 %v67
    %v124 = vunpack.c.h.b16 %v67
    %v125 = vunpack.c.l.b16 %v68
    %v126 = vpack.c.b16 %v105, %v102
    %v127 = vpack.c.b16 %v106, %v103
    %v128 = vpack.c.b16 %v107, %v104
    %v129 = vpack.c.b16 %v111, %v108
    %v130 = vpack.c.b16 %v112, %v109
    %v131 = vpack.c.b16 %v113, %v110
    %v132 = vpack.c.b16 %v117, %v114
    %v133 = vpack.c.b16 %v118, %v115
    %v134 = vpack.c.b16 %v119, %v116
    %v135 = vpack.c.b16 %v123, %v120
    %v136 = vpack.c.b16 %v124, %v121
    %v137 = vpack.c.b16 %v125, %v122
    %vm150 = vcmask 523264
    %v152 = vsel %vm150, %v49, 0
    %v155 = vsel %vm150, %v50, 0
    %v158 = vsel %vm150, %v51, 0
    %v161 = vsel %vm150, %v52, 0
    %163 = vmatprep.subr.bf16.mxu0 %v127
    %164 = vmatpush1.bf16.msra.mxu0 %v126
    %165 = vmatprep.subr.bf16.mxu0 %v130
    %166 = vmatpush1.bf16.msra.mxu0 %v129
    %167 = vmatprep.subr.bf16.mxu0 %v133
    %168 = vmatpush1.bf16.msra.mxu0 %v132
    %169 = vmatprep.subr.bf16.mxu0 %v136
    %170 = vmatpush1.bf16.msra.mxu0 %v135
    %171 = vmatprep.subr.bf16.mxu0 0
    %172 = vmatpush1.bf16.msra.mxu0 0
    %173 = vmatprep.subr.bf16.mxu0 0
    %174 = vmatpush1.bf16.msra.mxu0 0
    %175 = vmatprep.subr.bf16.mxu0 0
    %176 = vmatpush1.bf16.msra.mxu0 0
    %177 = vmatprep.subr.bf16.mxu0 0
    %178 = vmatpush1.bf16.msra.mxu0 0
    %179 = vmatprep.subr.bf16.mxu0 0
    %180 = vmatpush1.bf16.msra.mxu0 0
    %181 = vmatprep.subr.bf16.mxu0 0
    %182 = vmatpush1.bf16.msra.mxu0 0
    %183 = vmatprep.subr.bf16.mxu0 0
    %184 = vmatpush1.bf16.msra.mxu0 0
    %185 = vmatprep.subr.bf16.mxu0 0
    %186 = vmatpush1.bf16.msra.mxu0 0
    %187 = vmatprep.subr.bf16.mxu0 0
    %188 = vmatpush1.bf16.msra.mxu0 0
    %189 = vmatprep.subr.bf16.mxu0 0
    %190 = vmatpush1.bf16.msra.mxu0 0
    %191 = vmatprep.subr.bf16.mxu0 0
    %192 = vmatpush1.bf16.msra.mxu0 0
    %193 = vmatprep.subr.bf16.mxu0 0
    %194 = vmatpush1.bf16.msra.mxu0 0
    %195 = vmatprep.mubr.bf16.mxu0 0
    %196 = vmatmul.mubr.bf16.gmra.mrb[0].mxu0 %v152
    %v197 = vpop.f32.mrb[0].mxu0
    %v198 = vadd.f32 %v74, %v197
    %v199 = vpop.f32.mrb[0].mxu0
    %v200 = vadd.f32 %v78, %v199
    %v201 = vpop.f32.mrb[0].mxu0
    %v202 = vadd.f32 %v74, %v201
    %v203 = vpop.f32.mrb[0].mxu0
    %v204 = vadd.f32 %v78, %v203
    %205 = vmatprep.mubr.bf16.mxu0 0
    %206 = vmatmul.mubr.bf16.gmra.mrb[0].mxu0 %v155
    %v207 = vpop.f32.mrb[0].mxu0
    %v208 = vadd.f32 %v74, %v207
    %v209 = vpop.f32.mrb[0].mxu0
    %v210 = vadd.f32 %v78, %v209
    %v211 = vpop.f32.mrb[0].mxu0
    %v212 = vadd.f32 %v74, %v211
    %v213 = vpop.f32.mrb[0].mxu0
    %v214 = vadd.f32 %v78, %v213
    %215 = vmatprep.mubr.bf16.mxu0 0
    %216 = vmatmul.mubr.bf16.gmra.mrb[0].mxu0 %v158
    %v217 = vpop.f32.mrb[0].mxu0
    %v218 = vadd.f32 %v74, %v217
    %v219 = vpop.f32.mrb[0].mxu0
    %v220 = vadd.f32 %v78, %v219
    %v221 = vpop.f32.mrb[0].mxu0
    %v222 = vadd.f32 %v74, %v221
    %v223 = vpop.f32.mrb[0].mxu0
    %v224 = vadd.f32 %v78, %v223
    %225 = vmatprep.mubr.bf16.mxu0 0
    %226 = vmatmul.mubr.bf16.gmra.mrb[0].mxu0 %v161
    %v227 = vpop.f32.mrb[0].mxu0
    %v228 = vadd.f32 %v74, %v227
    %v229 = vpop.f32.mrb[0].mxu0
    %v230 = vadd.f32 %v78, %v229
    %v231 = vpop.f32.mrb[0].mxu0
    %v232 = vadd.f32 %v74, %v231
    %v233 = vpop.f32.mrb[0].mxu0
    %v234 = vadd.f32 %v78, %v233
    %235 = vdwg.mxu0
    %236 = vmatprep.subr.bf16.mxu0 0
    %237 = vmatpush1.bf16.msra.mxu0 %v128
    %238 = vmatprep.subr.bf16.mxu0 0
    %239 = vmatpush1.bf16.msra.mxu0 %v131
    %240 = vmatprep.subr.bf16.mxu0 0
    %241 = vmatpush1.bf16.msra.mxu0 %v134
    %242 = vmatprep.subr.bf16.mxu0 0
    %243 = vmatpush1.bf16.msra.mxu0 %v137
    %244 = vmatprep.subr.bf16.mxu0 0
    %245 = vmatpush1.bf16.msra.mxu0 0
    %246 = vmatprep.subr.bf16.mxu0 0
    %247 = vmatpush1.bf16.msra.mxu0 0
    %248 = vmatprep.subr.bf16.mxu0 0
    %249 = vmatpush1.bf16.msra.mxu0 0
    %250 = vmatprep.subr.bf16.mxu0 0
    %251 = vmatpush1.bf16.msra.mxu0 0
    %252 = vmatprep.subr.bf16.mxu0 0
    %253 = vmatpush1.bf16.msra.mxu0 0
    %254 = vmatprep.subr.bf16.mxu0 0
    %255 = vmatpush1.bf16.msra.mxu0 0
    %256 = vmatprep.subr.bf16.mxu0 0
    %257 = vmatpush1.bf16.msra.mxu0 0
    %258 = vmatprep.subr.bf16.mxu0 0
    %259 = vmatpush1.bf16.msra.mxu0 0
    %260 = vmatprep.subr.bf16.mxu0 0
    %261 = vmatpush1.bf16.msra.mxu0 0
    %262 = vmatprep.subr.bf16.mxu0 0
    %263 = vmatpush1.bf16.msra.mxu0 0
    %264 = vmatprep.subr.bf16.mxu0 0
    %265 = vmatpush1.bf16.msra.mxu0 0
    %266 = vmatprep.subr.bf16.mxu0 0
    %267 = vmatpush1.bf16.msra.mxu0 0
    %268 = vmatprep.mubr.bf16.mxu0 0
    %269 = vmatmul.mubr.bf16.gmra.mrb[0].mxu0 %v152
    %v270 = vpop.f32.mrb[0].mxu0
    %v271 = vadd.f32 %v82, %v270
    %v272 = vpop.f32.mrb[0].mxu0
    %v273 = vpop.f32.mrb[0].mxu0
    %v274 = vadd.f32 %v82, %v273
    %v275 = vpop.f32.mrb[0].mxu0
    %276 = vmatprep.mubr.bf16.mxu0 0
    %277 = vmatmul.mubr.bf16.gmra.mrb[0].mxu0 %v155
    %v278 = vpop.f32.mrb[0].mxu0
    %v279 = vadd.f32 %v82, %v278
    %v280 = vpop.f32.mrb[0].mxu0
    %v281 = vpop.f32.mrb[0].mxu0
    %v282 = vadd.f32 %v82, %v281
    %v283 = vpop.f32.mrb[0].mxu0
    %284 = vmatprep.mubr.bf16.mxu0 0
    %285 = vmatmul.mubr.bf16.gmra.mrb[0].mxu0 %v158
    %v286 = vpop.f32.mrb[0].mxu0
    %v287 = vadd.f32 %v82, %v286
    %v288 = vpop.f32.mrb[0].mxu0
    %v289 = vpop.f32.mrb[0].mxu0
    %v290 = vadd.f32 %v82, %v289
    %v291 = vpop.f32.mrb[0].mxu0
    %292 = vmatprep.mubr.bf16.mxu0 0
    %293 = vmatmul.mubr.bf16.gmra.mrb[0].mxu0 %v161
    %v294 = vpop.f32.mrb[0].mxu0
    %v295 = vadd.f32 %v82, %v294
    %v296 = vpop.f32.mrb[0].mxu0
    %v297 = vpop.f32.mrb[0].mxu0
    %v298 = vadd.f32 %v82, %v297
    %v299 = vpop.f32.mrb[0].mxu0
    %300 = vdwg.mxu0
    %301 = vst [vmem:[#allocation2] sm:$0xff] %v198
    %302 = vst [vmem:[#allocation2 + $0x8] sm:$0xff] %v200
    %303 = vst [vmem:[#allocation2 + $0x10] sm:$0xff] %v271
    %304 = vst [vmem:[#allocation2 + $0x18] sm:$0xff] %v202
    %305 = vst [vmem:[#allocation2 + $0x20] sm:$0xff] %v204
    %306 = vst [vmem:[#allocation2 + $0x28] sm:$0xff] %v274
    %307 = vst [vmem:[#allocation2 + $0x30] sm:$0xff] %v208
    %308 = vst [vmem:[#allocation2 + $0x38] sm:$0xff] %v210
    %309 = vst [vmem:[#allocation2 + $0x40] sm:$0xff] %v279
    %310 = vst [vmem:[#allocation2 + $0x48] sm:$0xff] %v212
    %311 = vst [vmem:[#allocation2 + $0x50] sm:$0xff] %v214
    %312 = vst [vmem:[#allocation2 + $0x58] sm:$0xff] %v282
    %313 = vst [vmem:[#allocation2 + $0x60] sm:$0xff] %v218
    %314 = vst [vmem:[#allocation2 + $0x68] sm:$0xff] %v220
    %315 = vst [vmem:[#allocation2 + $0x70] sm:$0xff] %v287
    %316 = vst [vmem:[#allocation2 + $0x78] sm:$0xff] %v222
    %317 = vst [vmem:[#allocation2 + $0x80] sm:$0xff] %v224
    %318 = vst [vmem:[#allocation2 + $0x88] sm:$0xff] %v290
    %319 = vst [vmem:[#allocation2 + $0x90] sm:$0xff] %v228
    %320 = vst [vmem:[#allocation2 + $0x98] sm:$0xff] %v230
    %321 = vst [vmem:[#allocation2 + $0xa0] sm:$0xff] %v295
    %322 = vst [vmem:[#allocation2 + $0xa8] sm:$0xff] %v232
    %323 = vst [vmem:[#allocation2 + $0xb0] sm:$0xff] %v234
    %324 = vst [vmem:[#allocation2 + $0xb8] sm:$0xff] %v298
    %v325 = vld [vmem:[#allocation4] sm:$0xff]
    %v326 = vld [vmem:[#allocation4 + $0x8] sm:$0xf]
    %v327 = vld [vmem:[#allocation4 + $0xc] sm:$0xff]
    %v328 = vld [vmem:[#allocation4 + $0x14] sm:$0xf]
    %v329 = vld [vmem:[#allocation4 + $0x18] sm:$0xff]
    %v330 = vld [vmem:[#allocation4 + $0x20] sm:$0xf]
    %v331 = vld [vmem:[#allocation4 + $0x24] sm:$0xff]
    %v332 = vld [vmem:[#allocation4 + $0x2c] sm:$0xf]
    %v333 = vld [vmem:[%s4] sm:$0x1]
    %v335 = vlaneseq
    %v336 = vshrl.u32 %v335, 7
    %v337 = vsub.s32 0, %v336
    %v338 = vrot.slane %v333, %v337
    %v340 = vld [vmem:[#allocation2] sm:$0xff]
    %v341 = vld [vmem:[#allocation2 + $0x8] sm:$0xff]
    %v342 = vld [vmem:[#allocation2 + $0x10] sm:$0xff]
    %v351 = vunpack.c.l.b16 %v325
    %v352 = vunpack.c.h.b16 %v325
    %v353 = vunpack.c.l.b16 %v326
    %v354 = vunpack.c.l.b16 %v327
    %v355 = vunpack.c.h.b16 %v327
    %v356 = vunpack.c.l.b16 %v328
    %v357 = vunpack.c.l.b16 %v329
    %v358 = vunpack.c.h.b16 %v329
    %v359 = vunpack.c.l.b16 %v330
    %v360 = vunpack.c.l.b16 %v331
    %v361 = vunpack.c.h.b16 %v331
    %v362 = vunpack.c.l.b16 %v332
    %v363 = vpack.c.b16 %v354, %v351
    %v364 = vpack.c.b16 %v355, %v352
    %v365 = vpack.c.b16 %v356, %v353
    %v366 = vpack.c.b16 %v360, %v357
    %v367 = vpack.c.b16 %v361, %v358
    %v368 = vpack.c.b16 %v362, %v359
    %vm375 = vcmask 261120
    %v377 = vsel %vm375, 0, 0
    %379 = vmatprep.subr.bf16.mxu0 %v364
    %380 = vmatpush1.bf16.msra.mxu0 %v363
    %381 = vmatprep.subr.bf16.mxu0 %v367
    %382 = vmatpush1.bf16.msra.mxu0 %v366
    %383 = vmatprep.subr.bf16.mxu0 0
    %384 = vmatpush1.bf16.msra.mxu0 0
    %385 = vmatprep.subr.bf16.mxu0 0
    %386 = vmatpush1.bf16.msra.mxu0 0
    %387 = vmatprep.subr.bf16.mxu0 0
    %388 = vmatpush1.bf16.msra.mxu0 0
    %389 = vmatprep.subr.bf16.mxu0 0
    %390 = vmatpush1.bf16.msra.mxu0 0
    %391 = vmatprep.subr.bf16.mxu0 0
    %392 = vmatpush1.bf16.msra.mxu0 0
    %393 = vmatprep.subr.bf16.mxu0 0
    %394 = vmatpush1.bf16.msra.mxu0 0
    %395 = vmatprep.subr.bf16.mxu0 0
    %396 = vmatpush1.bf16.msra.mxu0 0
    %397 = vmatprep.subr.bf16.mxu0 0
    %398 = vmatpush1.bf16.msra.mxu0 0
    %399 = vmatprep.subr.bf16.mxu0 0
    %400 = vmatpush1.bf16.msra.mxu0 0
    %401 = vmatprep.subr.bf16.mxu0 0
    %402 = vmatpush1.bf16.msra.mxu0 0
    %403 = vmatprep.subr.bf16.mxu0 0
    %404 = vmatpush1.bf16.msra.mxu0 0
    %405 = vmatprep.subr.bf16.mxu0 0
    %406 = vmatpush1.bf16.msra.mxu0 0
    %407 = vmatprep.subr.bf16.mxu0 0
    %408 = vmatpush1.bf16.msra.mxu0 0
    %409 = vmatprep.subr.bf16.mxu0 0
    %410 = vmatpush1.bf16.msra.mxu0 0
    %411 = vmatprep.mubr.bf16.mxu0 0
    %412 = vmatmul.mubr.bf16.gmra.mrb[0].mxu0 %v377
    %v413 = vpop.f32.mrb[0].mxu0
    %v414 = vadd.f32 0.0, %v413
    %v415 = vpop.f32.mrb[0].mxu0
    %v416 = vadd.f32 0.0, %v415
    %v417 = vpop.f32.mrb[0].mxu0
    %v418 = vpop.f32.mrb[0].mxu0
    %419 = vdwg.mxu0
    %420 = vmatprep.subr.bf16.mxu0 0
    %421 = vmatpush1.bf16.msra.mxu0 %v365
    %422 = vmatprep.subr.bf16.mxu0 0
    %423 = vmatpush1.bf16.msra.mxu0 %v368
    %424 = vmatprep.subr.bf16.mxu0 0
    %425 = vmatpush1.bf16.msra.mxu0 0
    %426 = vmatprep.subr.bf16.mxu0 0
    %427 = vmatpush1.bf16.msra.mxu0 0
    %428 = vmatprep.subr.bf16.mxu0 0
    %429 = vmatpush1.bf16.msra.mxu0 0
    %430 = vmatprep.subr.bf16.mxu0 0
    %431 = vmatpush1.bf16.msra.mxu0 0
    %432 = vmatprep.subr.bf16.mxu0 0
    %433 = vmatpush1.bf16.msra.mxu0 0
    %434 = vmatprep.subr.bf16.mxu0 0
    %435 = vmatpush1.bf16.msra.mxu0 0
    %436 = vmatprep.subr.bf16.mxu0 0
    %437 = vmatpush1.bf16.msra.mxu0 0
    %438 = vmatprep.subr.bf16.mxu0 0
    %439 = vmatpush1.bf16.msra.mxu0 0
    %440 = vmatprep.subr.bf16.mxu0 0
    %441 = vmatpush1.bf16.msra.mxu0 0
    %442 = vmatprep.subr.bf16.mxu0 0
    %443 = vmatpush1.bf16.msra.mxu0 0
    %444 = vmatprep.subr.bf16.mxu0 0
    %445 = vmatpush1.bf16.msra.mxu0 0
    %446 = vmatprep.subr.bf16.mxu0 0
    %447 = vmatpush1.bf16.msra.mxu0 0
    %448 = vmatprep.subr.bf16.mxu0 0
    %449 = vmatpush1.bf16.msra.mxu0 0
    %450 = vmatprep.subr.bf16.mxu0 0
    %451 = vmatpush1.bf16.msra.mxu0 0
    %452 = vmatprep.mubr.bf16.mxu0 0
    %453 = vmatmul.mubr.bf16.gmra.mrb[0].mxu0 %v377
    %v454 = vpop.f32.mrb[0].mxu0
    %v455 = vadd.f32 0.0, %v454
    %v456 = vpop.f32.mrb[0].mxu0
    %v457 = vpop.f32.mrb[0].mxu0
    %v458 = vpop.f32.mrb[0].mxu0
    %459 = vdwg.mxu0
    %v460 = vadd.f32 %v340, %v414
    %v461 = vxor.u32 %v460, 2147483648
    %v462 = vmul.f32 %v461, 1.442695
    %v463 = vpow.pop %v462
    %v464 = vadd.f32 %v463, 1.0
    %v465 = vrcp.pop %v464
    %v466 = vmul.f32 1.0, %v465
    %v467 = vadd.f32 %v341, %v416
    %v468 = vxor.u32 %v467, 2147483648
    %v469 = vmul.f32 %v468, 1.442695
    %v470 = vpow.pop %v469
    %v471 = vadd.f32 %v470, 1.0
    %v472 = vrcp.pop %v471
    %v473 = vmul.f32 1.0, %v472
    %v474 = vadd.f32 %v455, %v338
    %v475 = vmul.f32 %v466, %v474
    %v476 = vadd.f32 %v342, %v475
    %v477 = vtanh.pop %v476
    %v478 = vsub.f32 1.0, %v473
    %v479 = vmul.f32 %v478, %v477
    %v480 = vmul.f32 %v473, 0.0
    %v481 = vadd.f32 %v479, %v480
    %482 = vst [vmem:[#allocation3] sm:$0xff] %v481
    %v483 = vld [vmem:[#allocation2 + $0x18] sm:$0xff]
    %v484 = vld [vmem:[#allocation2 + $0x20] sm:$0xff]
    %v485 = vld [vmem:[#allocation2 + $0x28] sm:$0xff]
    %v486 = vpack.c.bf16 %v481, %v481
    %v488 = vsel %vm375, %v486, 0
    %490 = vmatprep.subr.bf16.mxu0 %v364
    %491 = vmatpush1.bf16.msra.mxu0 %v363
    %492 = vmatprep.subr.bf16.mxu0 %v367
    %493 = vmatpush1.bf16.msra.mxu0 %v366
    %494 = vmatprep.subr.bf16.mxu0 0
    %495 = vmatpush1.bf16.msra.mxu0 0
    %496 = vmatprep.subr.bf16.mxu0 0
    %497 = vmatpush1.bf16.msra.mxu0 0
    %498 = vmatprep.subr.bf16.mxu0 0
    %499 = vmatpush1.bf16.msra.mxu0 0
    %500 = vmatprep.subr.bf16.mxu0 0
    %501 = vmatpush1.bf16.msra.mxu0 0
    %502 = vmatprep.subr.bf16.mxu0 0
    %503 = vmatpush1.bf16.msra.mxu0 0
    %504 = vmatprep.subr.bf16.mxu0 0
    %505 = vmatpush1.bf16.msra.mxu0 0
    %506 = vmatprep.subr.bf16.mxu0 0
    %507 = vmatpush1.bf16.msra.mxu0 0
    %508 = vmatprep.subr.bf16.mxu0 0
    %509 = vmatpush1.bf16.msra.mxu0 0
    %510 = vmatprep.subr.bf16.mxu0 0
    %511 = vmatpush1.bf16.msra.mxu0 0
    %512 = vmatprep.subr.bf16.mxu0 0
    %513 = vmatpush1.bf16.msra.mxu0 0
    %514 = vmatprep.subr.bf16.mxu0 0
    %515 = vmatpush1.bf16.msra.mxu0 0
    %516 = vmatprep.subr.bf16.mxu0 0
    %517 = vmatpush1.bf16.msra.mxu0 0
    %518 = vmatprep.subr.bf16.mxu0 0
    %519 = vmatpush1.bf16.msra.mxu0 0
    %520 = vmatprep.subr.bf16.mxu0 0
    %521 = vmatpush1.bf16.msra.mxu0 0
    %522 = vmatprep.mubr.bf16.mxu0 0
    %523 = vmatmul.mubr.bf16.gmra.mrb[0].mxu0 %v488
    %v524 = vpop.f32.mrb[0].mxu0
    %v525 = vadd.f32 0.0, %v524
    %v526 = vpop.f32.mrb[0].mxu0
    %v527 = vadd.f32 0.0, %v526
    %v528 = vpop.f32.mrb[0].mxu0
    %v529 = vpop.f32.mrb[0].mxu0
    %530 = vdwg.mxu0
    %531 = vmatprep.subr.bf16.mxu0 0
    %532 = vmatpush1.bf16.msra.mxu0 %v365
    %533 = vmatprep.subr.bf16.mxu0 0
    %534 = vmatpush1.bf16.msra.mxu0 %v368
    %535 = vmatprep.subr.bf16.mxu0 0
    %536 = vmatpush1.bf16.msra.mxu0 0
    %537 = vmatprep.subr.bf16.mxu0 0
    %538 = vmatpush1.bf16.msra.mxu0 0
    %539 = vmatprep.subr.bf16.mxu0 0
    %540 = vmatpush1.bf16.msra.mxu0 0
    %541 = vmatprep.subr.bf16.mxu0 0
    %542 = vmatpush1.bf16.msra.mxu0 0
    %543 = vmatprep.subr.bf16.mxu0 0
    %544 = vmatpush1.bf16.msra.mxu0 0
    %545 = vmatprep.subr.bf16.mxu0 0
    %546 = vmatpush1.bf16.msra.mxu0 0
    %547 = vmatprep.subr.bf16.mxu0 0
    %548 = vmatpush1.bf16.msra.mxu0 0
    %549 = vmatprep.subr.bf16.mxu0 0
    %550 = vmatpush1.bf16.msra.mxu0 0
    %551 = vmatprep.subr.bf16.mxu0 0
    %552 = vmatpush1.bf16.msra.mxu0 0
    %553 = vmatprep.subr.bf16.mxu0 0
    %554 = vmatpush1.bf16.msra.mxu0 0
    %555 = vmatprep.subr.bf16.mxu0 0
    %556 = vmatpush1.bf16.msra.mxu0 0
    %557 = vmatprep.subr.bf16.mxu0 0
    %558 = vmatpush1.bf16.msra.mxu0 0
    %559 = vmatprep.subr.bf16.mxu0 0
    %560 = vmatpush1.bf16.msra.mxu0 0
    %561 = vmatprep.subr.bf16.mxu0 0
    %562 = vmatpush1.bf16.msra.mxu0 0
    %563 = vmatprep.mubr.bf16.mxu0 0
    %564 = vmatmul.mubr.bf16.gmra.mrb[0].mxu0 %v488
    %v565 = vpop.f32.mrb[0].mxu0
    %v566 = vadd.f32 0.0, %v565
    %v567 = vpop.f32.mrb[0].mxu0
    %v568 = vpop.f32.mrb[0].mxu0
    %v569 = vpop.f32.mrb[0].mxu0
    %570 = vdwg.mxu0
    %v571 = vadd.f32 %v483, %v525
    %v572 = vxor.u32 %v571, 2147483648
    %v573 = vmul.f32 %v572, 1.442695
    %v574 = vpow.pop %v573
    %v575 = vadd.f32 %v574, 1.0
    %v576 = vrcp.pop %v575
    %v577 = vmul.f32 1.0, %v576
    %v578 = vadd.f32 %v484, %v527
    %v579 = vxor.u32 %v578, 2147483648
    %v580 = vmul.f32 %v579, 1.442695
    %v581 = vpow.pop %v580
    %v582 = vadd.f32 %v581, 1.0
    %v583 = vrcp.pop %v582
    %v584 = vmul.f32 1.0, %v583
    %v585 = vadd.f32 %v566, %v338
    %v586 = vmul.f32 %v577, %v585
    %v587 = vadd.f32 %v485, %v586
    %v588 = vtanh.pop %v587
    %v589 = vsub.f32 1.0, %v584
    %v590 = vmul.f32 %v589, %v588
    %v591 = vmul.f32 %v584, %v481
    %v592 = vadd.f32 %v590, %v591
    %593 = vst [vmem:[#allocation3 + $0x8] sm:$0xff] %v592
    %v594 = vld [vmem:[#allocation2 + $0x30] sm:$0xff]
    %v595 = vld [vmem:[#allocation2 + $0x38] sm:$0xff]
    %v596 = vld [vmem:[#allocation2 + $0x40] sm:$0xff]
    %v597 = vpack.c.bf16 %v592, %v592
    %v599 = vsel %vm375, %v597, 0
    %601 = vmatprep.subr.bf16.mxu0 %v364
    %602 = vmatpush1.bf16.msra.mxu0 %v363
    %603 = vmatprep.subr.bf16.mxu0 %v367
    %604 = vmatpush1.bf16.msra.mxu0 %v366
    %605 = vmatprep.subr.bf16.mxu0 0
    %606 = vmatpush1.bf16.msra.mxu0 0
    %607 = vmatprep.subr.bf16.mxu0 0
    %608 = vmatpush1.bf16.msra.mxu0 0
    %609 = vmatprep.subr.bf16.mxu0 0
    %610 = vmatpush1.bf16.msra.mxu0 0
    %611 = vmatprep.subr.bf16.mxu0 0
    %612 = vmatpush1.bf16.msra.mxu0 0
    %613 = vmatprep.subr.bf16.mxu0 0
    %614 = vmatpush1.bf16.msra.mxu0 0
    %615 = vmatprep.subr.bf16.mxu0 0
    %616 = vmatpush1.bf16.msra.mxu0 0
    %617 = vmatprep.subr.bf16.mxu0 0
    %618 = vmatpush1.bf16.msra.mxu0 0
    %619 = vmatprep.subr.bf16.mxu0 0
    %620 = vmatpush1.bf16.msra.mxu0 0
    %621 = vmatprep.subr.bf16.mxu0 0
    %622 = vmatpush1.bf16.msra.mxu0 0
    %623 = vmatprep.subr.bf16.mxu0 0
    %624 = vmatpush1.bf16.msra.mxu0 0
    %625 = vmatprep.subr.bf16.mxu0 0
    %626 = vmatpush1.bf16.msra.mxu0 0
    %627 = vmatprep.subr.bf16.mxu0 0
    %628 = vmatpush1.bf16.msra.mxu0 0
    %629 = vmatprep.subr.bf16.mxu0 0
    %630 = vmatpush1.bf16.msra.mxu0 0
    %631 = vmatprep.subr.bf16.mxu0 0
    %632 = vmatpush1.bf16.msra.mxu0 0
    %633 = vmatprep.mubr.bf16.mxu0 0
    %634 = vmatmul.mubr.bf16.gmra.mrb[0].mxu0 %v599
    %v635 = vpop.f32.mrb[0].mxu0
    %v636 = vadd.f32 0.0, %v635
    %v637 = vpop.f32.mrb[0].mxu0
    %v638 = vadd.f32 0.0, %v637
    %v639 = vpop.f32.mrb[0].mxu0
    %v640 = vpop.f32.mrb[0].mxu0
    %641 = vdwg.mxu0
    %642 = vmatprep.subr.bf16.mxu0 0
    %643 = vmatpush1.bf16.msra.mxu0 %v365
    %644 = vmatprep.subr.bf16.mxu0 0
    %645 = vmatpush1.bf16.msra.mxu0 %v368
    %646 = vmatprep.subr.bf16.mxu0 0
    %647 = vmatpush1.bf16.msra.mxu0 0
    %648 = vmatprep.subr.bf16.mxu0 0
    %649 = vmatpush1.bf16.msra.mxu0 0
    %650 = vmatprep.subr.bf16.mxu0 0
    %651 = vmatpush1.bf16.msra.mxu0 0
    %652 = vmatprep.subr.bf16.mxu0 0
    %653 = vmatpush1.bf16.msra.mxu0 0
    %654 = vmatprep.subr.bf16.mxu0 0
    %655 = vmatpush1.bf16.msra.mxu0 0
    %656 = vmatprep.subr.bf16.mxu0 0
    %657 = vmatpush1.bf16.msra.mxu0 0
    %658 = vmatprep.subr.bf16.mxu0 0
    %659 = vmatpush1.bf16.msra.mxu0 0
    %660 = vmatprep.subr.bf16.mxu0 0
    %661 = vmatpush1.bf16.msra.mxu0 0
    %662 = vmatprep.subr.bf16.mxu0 0
    %663 = vmatpush1.bf16.msra.mxu0 0
    %664 = vmatprep.subr.bf16.mxu0 0
    %665 = vmatpush1.bf16.msra.mxu0 0
    %666 = vmatprep.subr.bf16.mxu0 0
    %667 = vmatpush1.bf16.msra.mxu0 0
    %668 = vmatprep.subr.bf16.mxu0 0
    %669 = vmatpush1.bf16.msra.mxu0 0
    %670 = vmatprep.subr.bf16.mxu0 0
    %671 = vmatpush1.bf16.msra.mxu0 0
    %672 = vmatprep.subr.bf16.mxu0 0
    %673 = vmatpush1.bf16.msra.mxu0 0
    %674 = vmatprep.mubr.bf16.mxu0 0
    %675 = vmatmul.mubr.bf16.gmra.mrb[0].mxu0 %v599
    %v676 = vpop.f32.mrb[0].mxu0
    %v677 = vadd.f32 0.0, %v676
    %v678 = vpop.f32.mrb[0].mxu0
    %v679 = vpop.f32.mrb[0].mxu0
    %v680 = vpop.f32.mrb[0].mxu0
    %681 = vdwg.mxu0
    %v682 = vadd.f32 %v594, %v636
    %v683 = vxor.u32 %v682, 2147483648
    %v684 = vmul.f32 %v683, 1.442695
    %v685 = vpow.pop %v684
    %v686 = vadd.f32 %v685, 1.0
    %v687 = vrcp.pop %v686
    %v688 = vmul.f32 1.0, %v687
    %v689 = vadd.f32 %v595, %v638
    %v690 = vxor.u32 %v689, 2147483648
    %v691 = vmul.f32 %v690, 1.442695
    %v692 = vpow.pop %v691
    %v693 = vadd.f32 %v692, 1.0
    %v694 = vrcp.pop %v693
    %v695 = vmul.f32 1.0, %v694
    %v696 = vadd.f32 %v677, %v338
    %v697 = vmul.f32 %v688, %v696
    %v698 = vadd.f32 %v596, %v697
    %v699 = vtanh.pop %v698
    %v700 = vsub.f32 1.0, %v695
    %v701 = vmul.f32 %v700, %v699
    %v702 = vmul.f32 %v695, %v592
    %v703 = vadd.f32 %v701, %v702
    %704 = vst [vmem:[#allocation3 + $0x10] sm:$0xff] %v703
    %v705 = vld [vmem:[#allocation2 + $0x48] sm:$0xff]
    %v706 = vld [vmem:[#allocation2 + $0x50] sm:$0xff]
    %v707 = vld [vmem:[#allocation2 + $0x58] sm:$0xff]
    %v708 = vpack.c.bf16 %v703, %v703
    %v710 = vsel %vm375, %v708, 0
    %712 = vmatprep.subr.bf16.mxu0 %v364
    %713 = vmatpush1.bf16.msra.mxu0 %v363
    %714 = vmatprep.subr.bf16.mxu0 %v367
    %715 = vmatpush1.bf16.msra.mxu0 %v366
    %716 = vmatprep.subr.bf16.mxu0 0
    %717 = vmatpush1.bf16.msra.mxu0 0
    %718 = vmatprep.subr.bf16.mxu0 0
    %719 = vmatpush1.bf16.msra.mxu0 0
    %720 = vmatprep.subr.bf16.mxu0 0
    %721 = vmatpush1.bf16.msra.mxu0 0
    %722 = vmatprep.subr.bf16.mxu0 0
    %723 = vmatpush1.bf16.msra.mxu0 0
    %724 = vmatprep.subr.bf16.mxu0 0
    %725 = vmatpush1.bf16.msra.mxu0 0
    %726 = vmatprep.subr.bf16.mxu0 0
    %727 = vmatpush1.bf16.msra.mxu0 0
    %728 = vmatprep.subr.bf16.mxu0 0
    %729 = vmatpush1.bf16.msra.mxu0 0
    %730 = vmatprep.subr.bf16.mxu0 0
    %731 = vmatpush1.bf16.msra.mxu0 0
    %732 = vmatprep.subr.bf16.mxu0 0
    %733 = vmatpush1.bf16.msra.mxu0 0
    %734 = vmatprep.subr.bf16.mxu0 0
    %735 = vmatpush1.bf16.msra.mxu0 0
    %736 = vmatprep.subr.bf16.mxu0 0
    %737 = vmatpush1.bf16.msra.mxu0 0
    %738 = vmatprep.subr.bf16.mxu0 0
    %739 = vmatpush1.bf16.msra.mxu0 0
    %740 = vmatprep.subr.bf16.mxu0 0
    %741 = vmatpush1.bf16.msra.mxu0 0
    %742 = vmatprep.subr.bf16.mxu0 0
    %743 = vmatpush1.bf16.msra.mxu0 0
    %744 = vmatprep.mubr.bf16.mxu0 0
    %745 = vmatmul.mubr.bf16.gmra.mrb[0].mxu0 %v710
    %v746 = vpop.f32.mrb[0].mxu0
    %v747 = vadd.f32 0.0, %v746
    %v748 = vpop.f32.mrb[0].mxu0
    %v749 = vadd.f32 0.0, %v748
    %v750 = vpop.f32.mrb[0].mxu0
    %v751 = vpop.f32.mrb[0].mxu0
    %752 = vdwg.mxu0
    %753 = vmatprep.subr.bf16.mxu0 0
    %754 = vmatpush1.bf16.msra.mxu0 %v365
    %755 = vmatprep.subr.bf16.mxu0 0
    %756 = vmatpush1.bf16.msra.mxu0 %v368
    %757 = vmatprep.subr.bf16.mxu0 0
    %758 = vmatpush1.bf16.msra.mxu0 0
    %759 = vmatprep.subr.bf16.mxu0 0
    %760 = vmatpush1.bf16.msra.mxu0 0
    %761 = vmatprep.subr.bf16.mxu0 0
    %762 = vmatpush1.bf16.msra.mxu0 0
    %763 = vmatprep.subr.bf16.mxu0 0
    %764 = vmatpush1.bf16.msra.mxu0 0
    %765 = vmatprep.subr.bf16.mxu0 0
    %766 = vmatpush1.bf16.msra.mxu0 0
    %767 = vmatprep.subr.bf16.mxu0 0
    %768 = vmatpush1.bf16.msra.mxu0 0
    %769 = vmatprep.subr.bf16.mxu0 0
    %770 = vmatpush1.bf16.msra.mxu0 0
    %771 = vmatprep.subr.bf16.mxu0 0
    %772 = vmatpush1.bf16.msra.mxu0 0
    %773 = vmatprep.subr.bf16.mxu0 0
    %774 = vmatpush1.bf16.msra.mxu0 0
    %775 = vmatprep.subr.bf16.mxu0 0
    %776 = vmatpush1.bf16.msra.mxu0 0
    %777 = vmatprep.subr.bf16.mxu0 0
    %778 = vmatpush1.bf16.msra.mxu0 0
    %779 = vmatprep.subr.bf16.mxu0 0
    %780 = vmatpush1.bf16.msra.mxu0 0
    %781 = vmatprep.subr.bf16.mxu0 0
    %782 = vmatpush1.bf16.msra.mxu0 0
    %783 = vmatprep.subr.bf16.mxu0 0
    %784 = vmatpush1.bf16.msra.mxu0 0
    %785 = vmatprep.mubr.bf16.mxu0 0
    %786 = vmatmul.mubr.bf16.gmra.mrb[0].mxu0 %v710
    %v787 = vpop.f32.mrb[0].mxu0
    %v788 = vadd.f32 0.0, %v787
    %v789 = vpop.f32.mrb[0].mxu0
    %v790 = vpop.f32.mrb[0].mxu0
    %v791 = vpop.f32.mrb[0].mxu0
    %792 = vdwg.mxu0
    %v793 = vadd.f32 %v705, %v747
    %v794 = vxor.u32 %v793, 2147483648
    %v795 = vmul.f32 %v794, 1.442695
    %v796 = vpow.pop %v795
    %v797 = vadd.f32 %v796, 1.0
    %v798 = vrcp.pop %v797
    %v799 = vmul.f32 1.0, %v798
    %v800 = vadd.f32 %v706, %v749
    %v801 = vxor.u32 %v800, 2147483648
    %v802 = vmul.f32 %v801, 1.442695
    %v803 = vpow.pop %v802
    %v804 = vadd.f32 %v803, 1.0
    %v805 = vrcp.pop %v804
    %v806 = vmul.f32 1.0, %v805
    %v807 = vadd.f32 %v788, %v338
    %v808 = vmul.f32 %v799, %v807
    %v809 = vadd.f32 %v707, %v808
    %v810 = vtanh.pop %v809
    %v811 = vsub.f32 1.0, %v806
    %v812 = vmul.f32 %v811, %v810
    %v813 = vmul.f32 %v806, %v703
    %v814 = vadd.f32 %v812, %v813
    %815 = vst [vmem:[#allocation3 + $0x18] sm:$0xff] %v814
    %v816 = vld [vmem:[#allocation2 + $0x60] sm:$0xff]
    %v817 = vld [vmem:[#allocation2 + $0x68] sm:$0xff]
    %v818 = vld [vmem:[#allocation2 + $0x70] sm:$0xff]
    %v819 = vpack.c.bf16 %v814, %v814
    %v821 = vsel %vm375, %v819, 0
    %823 = vmatprep.subr.bf16.mxu0 %v364
    %824 = vmatpush1.bf16.msra.mxu0 %v363
    %825 = vmatprep.subr.bf16.mxu0 %v367
    %826 = vmatpush1.bf16.msra.mxu0 %v366
    %827 = vmatprep.subr.bf16.mxu0 0
    %828 = vmatpush1.bf16.msra.mxu0 0
    %829 = vmatprep.subr.bf16.mxu0 0
    %830 = vmatpush1.bf16.msra.mxu0 0
    %831 = vmatprep.subr.bf16.mxu0 0
    %832 = vmatpush1.bf16.msra.mxu0 0
    %833 = vmatprep.subr.bf16.mxu0 0
    %834 = vmatpush1.bf16.msra.mxu0 0
    %835 = vmatprep.subr.bf16.mxu0 0
    %836 = vmatpush1.bf16.msra.mxu0 0
    %837 = vmatprep.subr.bf16.mxu0 0
    %838 = vmatpush1.bf16.msra.mxu0 0
    %839 = vmatprep.subr.bf16.mxu0 0
    %840 = vmatpush1.bf16.msra.mxu0 0
    %841 = vmatprep.subr.bf16.mxu0 0
    %842 = vmatpush1.bf16.msra.mxu0 0
    %843 = vmatprep.subr.bf16.mxu0 0
    %844 = vmatpush1.bf16.msra.mxu0 0
    %845 = vmatprep.subr.bf16.mxu0 0
    %846 = vmatpush1.bf16.msra.mxu0 0
    %847 = vmatprep.subr.bf16.mxu0 0
    %848 = vmatpush1.bf16.msra.mxu0 0
    %849 = vmatprep.subr.bf16.mxu0 0
    %850 = vmatpush1.bf16.msra.mxu0 0
    %851 = vmatprep.subr.bf16.mxu0 0
    %852 = vmatpush1.bf16.msra.mxu0 0
    %853 = vmatprep.subr.bf16.mxu0 0
    %854 = vmatpush1.bf16.msra.mxu0 0
    %855 = vmatprep.mubr.bf16.mxu0 0
    %856 = vmatmul.mubr.bf16.gmra.mrb[0].mxu0 %v821
    %v857 = vpop.f32.mrb[0].mxu0
    %v858 = vadd.f32 0.0, %v857
    %v859 = vpop.f32.mrb[0].mxu0
    %v860 = vadd.f32 0.0, %v859
    %v861 = vpop.f32.mrb[0].mxu0
    %v862 = vpop.f32.mrb[0].mxu0
    %863 = vdwg.mxu0
    %864 = vmatprep.subr.bf16.mxu0 0
    %865 = vmatpush1.bf16.msra.mxu0 %v365
    %866 = vmatprep.subr.bf16.mxu0 0
    %867 = vmatpush1.bf16.msra.mxu0 %v368
    %868 = vmatprep.subr.bf16.mxu0 0
    %869 = vmatpush1.bf16.msra.mxu0 0
    %870 = vmatprep.subr.bf16.mxu0 0
    %871 = vmatpush1.bf16.msra.mxu0 0
    %872 = vmatprep.subr.bf16.mxu0 0
    %873 = vmatpush1.bf16.msra.mxu0 0
    %874 = vmatprep.subr.bf16.mxu0 0
    %875 = vmatpush1.bf16.msra.mxu0 0
    %876 = vmatprep.subr.bf16.mxu0 0
    %877 = vmatpush1.bf16.msra.mxu0 0
    %878 = vmatprep.subr.bf16.mxu0 0
    %879 = vmatpush1.bf16.msra.mxu0 0
    %880 = vmatprep.subr.bf16.mxu0 0
    %881 = vmatpush1.bf16.msra.mxu0 0
    %882 = vmatprep.subr.bf16.mxu0 0
    %883 = vmatpush1.bf16.msra.mxu0 0
    %884 = vmatprep.subr.bf16.mxu0 0
    %885 = vmatpush1.bf16.msra.mxu0 0
    %886 = vmatprep.subr.bf16.mxu0 0
    %887 = vmatpush1.bf16.msra.mxu0 0
    %888 = vmatprep.subr.bf16.mxu0 0
    %889 = vmatpush1.bf16.msra.mxu0 0
    %890 = vmatprep.subr.bf16.mxu0 0
    %891 = vmatpush1.bf16.msra.mxu0 0
    %892 = vmatprep.subr.bf16.mxu0 0
    %893 = vmatpush1.bf16.msra.mxu0 0
    %894 = vmatprep.subr.bf16.mxu0 0
    %895 = vmatpush1.bf16.msra.mxu0 0
    %896 = vmatprep.mubr.bf16.mxu0 0
    %897 = vmatmul.mubr.bf16.gmra.mrb[0].mxu0 %v821
    %v898 = vpop.f32.mrb[0].mxu0
    %v899 = vadd.f32 0.0, %v898
    %v900 = vpop.f32.mrb[0].mxu0
    %v901 = vpop.f32.mrb[0].mxu0
    %v902 = vpop.f32.mrb[0].mxu0
    %903 = vdwg.mxu0
    %v904 = vadd.f32 %v816, %v858
    %v905 = vxor.u32 %v904, 2147483648
    %v906 = vmul.f32 %v905, 1.442695
    %v907 = vpow.pop %v906
    %v908 = vadd.f32 %v907, 1.0
    %v909 = vrcp.pop %v908
    %v910 = vmul.f32 1.0, %v909
    %v911 = vadd.f32 %v817, %v860
    %v912 = vxor.u32 %v911, 2147483648
    %v913 = vmul.f32 %v912, 1.442695
    %v914 = vpow.pop %v913
    %v915 = vadd.f32 %v914, 1.0
    %v916 = vrcp.pop %v915
    %v917 = vmul.f32 1.0, %v916
    %v918 = vadd.f32 %v899, %v338
    %v919 = vmul.f32 %v910, %v918
    %v920 = vadd.f32 %v818, %v919
    %v921 = vtanh.pop %v920
    %v922 = vsub.f32 1.0, %v917
    %v923 = vmul.f32 %v922, %v921
    %v924 = vmul.f32 %v917, %v814
    %v925 = vadd.f32 %v923, %v924
    %926 = vst [vmem:[#allocation3 + $0x20] sm:$0xff] %v925
    %v927 = vld [vmem:[#allocation2 + $0x78] sm:$0xff]
    %v928 = vld [vmem:[#allocation2 + $0x80] sm:$0xff]
    %v929 = vld [vmem:[#allocation2 + $0x88] sm:$0xff]
    %v930 = vpack.c.bf16 %v925, %v925
    %v932 = vsel %vm375, %v930, 0
    %934 = vmatprep.subr.bf16.mxu0 %v364
    %935 = vmatpush1.bf16.msra.mxu0 %v363
    %936 = vmatprep.subr.bf16.mxu0 %v367
    %937 = vmatpush1.bf16.msra.mxu0 %v366
    %938 = vmatprep.subr.bf16.mxu0 0
    %939 = vmatpush1.bf16.msra.mxu0 0
    %940 = vmatprep.subr.bf16.mxu0 0
    %941 = vmatpush1.bf16.msra.mxu0 0
    %942 = vmatprep.subr.bf16.mxu0 0
    %943 = vmatpush1.bf16.msra.mxu0 0
    %944 = vmatprep.subr.bf16.mxu0 0
    %945 = vmatpush1.bf16.msra.mxu0 0
    %946 = vmatprep.subr.bf16.mxu0 0
    %947 = vmatpush1.bf16.msra.mxu0 0
    %948 = vmatprep.subr.bf16.mxu0 0
    %949 = vmatpush1.bf16.msra.mxu0 0
    %950 = vmatprep.subr.bf16.mxu0 0
    %951 = vmatpush1.bf16.msra.mxu0 0
    %952 = vmatprep.subr.bf16.mxu0 0
    %953 = vmatpush1.bf16.msra.mxu0 0
    %954 = vmatprep.subr.bf16.mxu0 0
    %955 = vmatpush1.bf16.msra.mxu0 0
    %956 = vmatprep.subr.bf16.mxu0 0
    %957 = vmatpush1.bf16.msra.mxu0 0
    %958 = vmatprep.subr.bf16.mxu0 0
    %959 = vmatpush1.bf16.msra.mxu0 0
    %960 = vmatprep.subr.bf16.mxu0 0
    %961 = vmatpush1.bf16.msra.mxu0 0
    %962 = vmatprep.subr.bf16.mxu0 0
    %963 = vmatpush1.bf16.msra.mxu0 0
    %964 = vmatprep.subr.bf16.mxu0 0
    %965 = vmatpush1.bf16.msra.mxu0 0
    %966 = vmatprep.mubr.bf16.mxu0 0
    %967 = vmatmul.mubr.bf16.gmra.mrb[0].mxu0 %v932
    %v968 = vpop.f32.mrb[0].mxu0
    %v969 = vadd.f32 0.0, %v968
    %v970 = vpop.f32.mrb[0].mxu0
    %v971 = vadd.f32 0.0, %v970
    %v972 = vpop.f32.mrb[0].mxu0
    %v973 = vpop.f32.mrb[0].mxu0
    %974 = vdwg.mxu0
    %975 = vmatprep.subr.bf16.mxu0 0
    %976 = vmatpush1.bf16.msra.mxu0 %v365
    %977 = vmatprep.subr.bf16.mxu0 0
    %978 = vmatpush1.bf16.msra.mxu0 %v368
    %979 = vmatprep.subr.bf16.mxu0 0
    %980 = vmatpush1.bf16.msra.mxu0 0
    %981 = vmatprep.subr.bf16.mxu0 0
    %982 = vmatpush1.bf16.msra.mxu0 0
    %983 = vmatprep.subr.bf16.mxu0 0
    %984 = vmatpush1.bf16.msra.mxu0 0
    %985 = vmatprep.subr.bf16.mxu0 0
    %986 = vmatpush1.bf16.msra.mxu0 0
    %987 = vmatprep.subr.bf16.mxu0 0
    %988 = vmatpush1.bf16.msra.mxu0 0
    %989 = vmatprep.subr.bf16.mxu0 0
    %990 = vmatpush1.bf16.msra.mxu0 0
    %991 = vmatprep.subr.bf16.mxu0 0
    %992 = vmatpush1.bf16.msra.mxu0 0
    %993 = vmatprep.subr.bf16.mxu0 0
    %994 = vmatpush1.bf16.msra.mxu0 0
    %995 = vmatprep.subr.bf16.mxu0 0
    %996 = vmatpush1.bf16.msra.mxu0 0
    %997 = vmatprep.subr.bf16.mxu0 0
    %998 = vmatpush1.bf16.msra.mxu0 0
    %999 = vmatprep.subr.bf16.mxu0 0
    %1000 = vmatpush1.bf16.msra.mxu0 0
    %1001 = vmatprep.subr.bf16.mxu0 0
    %1002 = vmatpush1.bf16.msra.mxu0 0
    %1003 = vmatprep.subr.bf16.mxu0 0
    %1004 = vmatpush1.bf16.msra.mxu0 0
    %1005 = vmatprep.subr.bf16.mxu0 0
    %1006 = vmatpush1.bf16.msra.mxu0 0
    %1007 = vmatprep.mubr.bf16.mxu0 0
    %1008 = vmatmul.mubr.bf16.gmra.mrb[0].mxu0 %v932
    %v1009 = vpop.f32.mrb[0].mxu0
    %v1010 = vadd.f32 0.0, %v1009
    %v1011 = vpop.f32.mrb[0].mxu0
    %v1012 = vpop.f32.mrb[0].mxu0
    %v1013 = vpop.f32.mrb[0].mxu0
    %1014 = vdwg.mxu0
    %v1015 = vadd.f32 %v927, %v969
    %v1016 = vxor.u32 %v1015, 2147483648
    %v1017 = vmul.f32 %v1016, 1.442695
    %v1018 = vpow.pop %v1017
    %v1019 = vadd.f32 %v1018, 1.0
    %v1020 = vrcp.pop %v1019
    %v1021 = vmul.f32 1.0, %v1020
    %v1022 = vadd.f32 %v928, %v971
    %v1023 = vxor.u32 %v1022, 2147483648
    %v1024 = vmul.f32 %v1023, 1.442695
    %v1025 = vpow.pop %v1024
    %v1026 = vadd.f32 %v1025, 1.0
    %v1027 = vrcp.pop %v1026
    %v1028 = vmul.f32 1.0, %v1027
    %v1029 = vadd.f32 %v1010, %v338
    %v1030 = vmul.f32 %v1021, %v1029
    %v1031 = vadd.f32 %v929, %v1030
    %v1032 = vtanh.pop %v1031
    %v1033 = vsub.f32 1.0, %v1028
    %v1034 = vmul.f32 %v1033, %v1032
    %v1035 = vmul.f32 %v1028, %v925
    %v1036 = vadd.f32 %v1034, %v1035
    %1037 = vst [vmem:[#allocation3 + $0x28] sm:$0xff] %v1036
    %v1038 = vld [vmem:[#allocation2 + $0x90] sm:$0xff]
    %v1039 = vld [vmem:[#allocation2 + $0x98] sm:$0xff]
    %v1040 = vld [vmem:[#allocation2 + $0xa0] sm:$0xff]
    %v1041 = vpack.c.bf16 %v1036, %v1036
    %v1043 = vsel %vm375, %v1041, 0
    %1045 = vmatprep.subr.bf16.mxu0 %v364
    %1046 = vmatpush1.bf16.msra.mxu0 %v363
    %1047 = vmatprep.subr.bf16.mxu0 %v367
    %1048 = vmatpush1.bf16.msra.mxu0 %v366
    %1049 = vmatprep.subr.bf16.mxu0 0
    %1050 = vmatpush1.bf16.msra.mxu0 0
    %1051 = vmatprep.subr.bf16.mxu0 0
    %1052 = vmatpush1.bf16.msra.mxu0 0
    %1053 = vmatprep.subr.bf16.mxu0 0
    %1054 = vmatpush1.bf16.msra.mxu0 0
    %1055 = vmatprep.subr.bf16.mxu0 0
    %1056 = vmatpush1.bf16.msra.mxu0 0
    %1057 = vmatprep.subr.bf16.mxu0 0
    %1058 = vmatpush1.bf16.msra.mxu0 0
    %1059 = vmatprep.subr.bf16.mxu0 0
    %1060 = vmatpush1.bf16.msra.mxu0 0
    %1061 = vmatprep.subr.bf16.mxu0 0
    %1062 = vmatpush1.bf16.msra.mxu0 0
    %1063 = vmatprep.subr.bf16.mxu0 0
    %1064 = vmatpush1.bf16.msra.mxu0 0
    %1065 = vmatprep.subr.bf16.mxu0 0
    %1066 = vmatpush1.bf16.msra.mxu0 0
    %1067 = vmatprep.subr.bf16.mxu0 0
    %1068 = vmatpush1.bf16.msra.mxu0 0
    %1069 = vmatprep.subr.bf16.mxu0 0
    %1070 = vmatpush1.bf16.msra.mxu0 0
    %1071 = vmatprep.subr.bf16.mxu0 0
    %1072 = vmatpush1.bf16.msra.mxu0 0
    %1073 = vmatprep.subr.bf16.mxu0 0
    %1074 = vmatpush1.bf16.msra.mxu0 0
    %1075 = vmatprep.subr.bf16.mxu0 0
    %1076 = vmatpush1.bf16.msra.mxu0 0
    %1077 = vmatprep.mubr.bf16.mxu0 0
    %1078 = vmatmul.mubr.bf16.gmra.mrb[0].mxu0 %v1043
    %v1079 = vpop.f32.mrb[0].mxu0
    %v1080 = vadd.f32 0.0, %v1079
    %v1081 = vpop.f32.mrb[0].mxu0
    %v1082 = vadd.f32 0.0, %v1081
    %v1083 = vpop.f32.mrb[0].mxu0
    %v1084 = vpop.f32.mrb[0].mxu0
    %1085 = vdwg.mxu0
    %1086 = vmatprep.subr.bf16.mxu0 0
    %1087 = vmatpush1.bf16.msra.mxu0 %v365
    %1088 = vmatprep.subr.bf16.mxu0 0
    %1089 = vmatpush1.bf16.msra.mxu0 %v368
    %1090 = vmatprep.subr.bf16.mxu0 0
    %1091 = vmatpush1.bf16.msra.mxu0 0
    %1092 = vmatprep.subr.bf16.mxu0 0
    %1093 = vmatpush1.bf16.msra.mxu0 0
    %1094 = vmatprep.subr.bf16.mxu0 0
    %1095 = vmatpush1.bf16.msra.mxu0 0
    %1096 = vmatprep.subr.bf16.mxu0 0
    %1097 = vmatpush1.bf16.msra.mxu0 0
    %1098 = vmatprep.subr.bf16.mxu0 0
    %1099 = vmatpush1.bf16.msra.mxu0 0
    %1100 = vmatprep.subr.bf16.mxu0 0
    %1101 = vmatpush1.bf16.msra.mxu0 0
    %1102 = vmatprep.subr.bf16.mxu0 0
    %1103 = vmatpush1.bf16.msra.mxu0 0
    %1104 = vmatprep.subr.bf16.mxu0 0
    %1105 = vmatpush1.bf16.msra.mxu0 0
    %1106 = vmatprep.subr.bf16.mxu0 0
    %1107 = vmatpush1.bf16.msra.mxu0 0
    %1108 = vmatprep.subr.bf16.mxu0 0
    %1109 = vmatpush1.bf16.msra.mxu0 0
    %1110 = vmatprep.subr.bf16.mxu0 0
    %1111 = vmatpush1.bf16.msra.mxu0 0
    %1112 = vmatprep.subr.bf16.mxu0 0
    %1113 = vmatpush1.bf16.msra.mxu0 0
    %1114 = vmatprep.subr.bf16.mxu0 0
    %1115 = vmatpush1.bf16.msra.mxu0 0
    %1116 = vmatprep.subr.bf16.mxu0 0
    %1117 = vmatpush1.bf16.msra.mxu0 0
    %1118 = vmatprep.mubr.bf16.mxu0 0
    %1119 = vmatmul.mubr.bf16.gmra.mrb[0].mxu0 %v1043
    %v1120 = vpop.f32.mrb[0].mxu0
    %v1121 = vadd.f32 0.0, %v1120
    %v1122 = vpop.f32.mrb[0].mxu0
    %v1123 = vpop.f32.mrb[0].mxu0
    %v1124 = vpop.f32.mrb[0].mxu0
    %1125 = vdwg.mxu0
    %v1126 = vadd.f32 %v1038, %v1080
    %v1127 = vxor.u32 %v1126, 2147483648
    %v1128 = vmul.f32 %v1127, 1.442695
    %v1129 = vpow.pop %v1128
    %v1130 = vadd.f32 %v1129, 1.0
    %v1131 = vrcp.pop %v1130
    %v1132 = vmul.f32 1.0, %v1131
    %v1133 = vadd.f32 %v1039, %v1082
    %v1134 = vxor.u32 %v1133, 2147483648
    %v1135 = vmul.f32 %v1134, 1.442695
    %v1136 = vpow.pop %v1135
    %v1137 = vadd.f32 %v1136, 1.0
    %v1138 = vrcp.pop %v1137
    %v1139 = vmul.f32 1.0, %v1138
    %v1140 = vadd.f32 %v1121, %v338
    %v1141 = vmul.f32 %v1132, %v1140
    %v1142 = vadd.f32 %v1040, %v1141
    %v1143 = vtanh.pop %v1142
    %v1144 = vsub.f32 1.0, %v1139
    %v1145 = vmul.f32 %v1144, %v1143
    %v1146 = vmul.f32 %v1139, %v1036
    %v1147 = vadd.f32 %v1145, %v1146
    %1148 = vst [vmem:[#allocation3 + $0x30] sm:$0xff] %v1147
    %v1149 = vld [vmem:[#allocation2 + $0xa8] sm:$0xff]
    %v1150 = vld [vmem:[#allocation2 + $0xb0] sm:$0xff]
    %v1151 = vld [vmem:[#allocation2 + $0xb8] sm:$0xff]
    %v1152 = vpack.c.bf16 %v1147, %v1147
    %v1154 = vsel %vm375, %v1152, 0
    %1156 = vmatprep.subr.bf16.mxu0 %v364
    %1157 = vmatpush1.bf16.msra.mxu0 %v363
    %1158 = vmatprep.subr.bf16.mxu0 %v367
    %1159 = vmatpush1.bf16.msra.mxu0 %v366
    %1160 = vmatprep.subr.bf16.mxu0 0
    %1161 = vmatpush1.bf16.msra.mxu0 0
    %1162 = vmatprep.subr.bf16.mxu0 0
    %1163 = vmatpush1.bf16.msra.mxu0 0
    %1164 = vmatprep.subr.bf16.mxu0 0
    %1165 = vmatpush1.bf16.msra.mxu0 0
    %1166 = vmatprep.subr.bf16.mxu0 0
    %1167 = vmatpush1.bf16.msra.mxu0 0
    %1168 = vmatprep.subr.bf16.mxu0 0
    %1169 = vmatpush1.bf16.msra.mxu0 0
    %1170 = vmatprep.subr.bf16.mxu0 0
    %1171 = vmatpush1.bf16.msra.mxu0 0
    %1172 = vmatprep.subr.bf16.mxu0 0
    %1173 = vmatpush1.bf16.msra.mxu0 0
    %1174 = vmatprep.subr.bf16.mxu0 0
    %1175 = vmatpush1.bf16.msra.mxu0 0
    %1176 = vmatprep.subr.bf16.mxu0 0
    %1177 = vmatpush1.bf16.msra.mxu0 0
    %1178 = vmatprep.subr.bf16.mxu0 0
    %1179 = vmatpush1.bf16.msra.mxu0 0
    %1180 = vmatprep.subr.bf16.mxu0 0
    %1181 = vmatpush1.bf16.msra.mxu0 0
    %1182 = vmatprep.subr.bf16.mxu0 0
    %1183 = vmatpush1.bf16.msra.mxu0 0
    %1184 = vmatprep.subr.bf16.mxu0 0
    %1185 = vmatpush1.bf16.msra.mxu0 0
    %1186 = vmatprep.subr.bf16.mxu0 0
    %1187 = vmatpush1.bf16.msra.mxu0 0
    %1188 = vmatprep.mubr.bf16.mxu0 0
    %1189 = vmatmul.mubr.bf16.gmra.mrb[0].mxu0 %v1154
    %v1190 = vpop.f32.mrb[0].mxu0
    %v1191 = vadd.f32 0.0, %v1190
    %v1192 = vpop.f32.mrb[0].mxu0
    %v1193 = vadd.f32 0.0, %v1192
    %v1194 = vpop.f32.mrb[0].mxu0
    %v1195 = vpop.f32.mrb[0].mxu0
    %1196 = vdwg.mxu0
    %1197 = vmatprep.subr.bf16.mxu0 0
    %1198 = vmatpush1.bf16.msra.mxu0 %v365
    %1199 = vmatprep.subr.bf16.mxu0 0
    %1200 = vmatpush1.bf16.msra.mxu0 %v368
    %1201 = vmatprep.subr.bf16.mxu0 0
    %1202 = vmatpush1.bf16.msra.mxu0 0
    %1203 = vmatprep.subr.bf16.mxu0 0
    %1204 = vmatpush1.bf16.msra.mxu0 0
    %1205 = vmatprep.subr.bf16.mxu0 0
    %1206 = vmatpush1.bf16.msra.mxu0 0
    %1207 = vmatprep.subr.bf16.mxu0 0
    %1208 = vmatpush1.bf16.msra.mxu0 0
    %1209 = vmatprep.subr.bf16.mxu0 0
    %1210 = vmatpush1.bf16.msra.mxu0 0
    %1211 = vmatprep.subr.bf16.mxu0 0
    %1212 = vmatpush1.bf16.msra.mxu0 0
    %1213 = vmatprep.subr.bf16.mxu0 0
    %1214 = vmatpush1.bf16.msra.mxu0 0
    %1215 = vmatprep.subr.bf16.mxu0 0
    %1216 = vmatpush1.bf16.msra.mxu0 0
    %1217 = vmatprep.subr.bf16.mxu0 0
    %1218 = vmatpush1.bf16.msra.mxu0 0
    %1219 = vmatprep.subr.bf16.mxu0 0
    %1220 = vmatpush1.bf16.msra.mxu0 0
    %1221 = vmatprep.subr.bf16.mxu0 0
    %1222 = vmatpush1.bf16.msra.mxu0 0
    %1223 = vmatprep.subr.bf16.mxu0 0
    %1224 = vmatpush1.bf16.msra.mxu0 0
    %1225 = vmatprep.subr.bf16.mxu0 0
    %1226 = vmatpush1.bf16.msra.mxu0 0
    %1227 = vmatprep.subr.bf16.mxu0 0
    %1228 = vmatpush1.bf16.msra.mxu0 0
    %1229 = vmatprep.mubr.bf16.mxu0 0
    %1230 = vmatmul.mubr.bf16.gmra.mrb[0].mxu0 %v1154
    %v1231 = vpop.f32.mrb[0].mxu0
    %v1232 = vadd.f32 0.0, %v1231
    %v1233 = vpop.f32.mrb[0].mxu0
    %v1234 = vpop.f32.mrb[0].mxu0
    %v1235 = vpop.f32.mrb[0].mxu0
    %1236 = vdwg.mxu0
    %v1237 = vadd.f32 %v1149, %v1191
    %v1238 = vxor.u32 %v1237, 2147483648
    %v1239 = vmul.f32 %v1238, 1.442695
    %v1240 = vpow.pop %v1239
    %v1241 = vadd.f32 %v1240, 1.0
    %v1242 = vrcp.pop %v1241
    %v1243 = vmul.f32 1.0, %v1242
    %v1244 = vadd.f32 %v1150, %v1193
    %v1245 = vxor.u32 %v1244, 2147483648
    %v1246 = vmul.f32 %v1245, 1.442695
    %v1247 = vpow.pop %v1246
    %v1248 = vadd.f32 %v1247, 1.0
    %v1249 = vrcp.pop %v1248
    %v1250 = vmul.f32 1.0, %v1249
    %v1251 = vadd.f32 %v1232, %v338
    %v1252 = vmul.f32 %v1243, %v1251
    %v1253 = vadd.f32 %v1151, %v1252
    %v1254 = vtanh.pop %v1253
    %v1255 = vsub.f32 1.0, %v1250
    %v1256 = vmul.f32 %v1255, %v1254
    %v1257 = vmul.f32 %v1250, %v1147
    %v1258 = vadd.f32 %v1256, %v1257
    %1259 = vst [vmem:[#allocation3 + $0x38] sm:$0xff] %v1258
    %v1260 = vld [vmem:[#allocation3] sm:$0xff]
    %v1261 = vld [vmem:[#allocation3 + $0x8] sm:$0xff]
    %v1262 = vld [vmem:[#allocation3 + $0x10] sm:$0xff]
    %v1263 = vld [vmem:[#allocation3 + $0x18] sm:$0xff]
    %v1264 = vld [vmem:[#allocation3 + $0x20] sm:$0xff]
    %v1265 = vld [vmem:[#allocation3 + $0x28] sm:$0xff]
    %v1266 = vld [vmem:[#allocation3 + $0x30] sm:$0xff]
    %v1267 = vld [vmem:[#allocation3 + $0x38] sm:$0xff]
    %v1268 = vpack.c.bf16 %v1261, %v1260
    %v1269 = vpack.c.bf16 %v1263, %v1262
    %v1270 = vpack.c.bf16 %v1265, %v1264
    %v1271 = vpack.c.bf16 %v1267, %v1266
    %v1272 = vld [vmem:[%s5] sm:$0xf]
    %v1273 = vld [vmem:[%s5 + $0x4] sm:$0xf]
    %v1274 = vld [vmem:[%s5 + $0x8] sm:$0xf]
    %v1275 = vld [vmem:[%s5 + $0xc] sm:$0xf]
    %v1276 = vld [vmem:[%s6] sm:$0x1]
    %v1278 = vlaneseq
    %v1279 = vshrl.u32 %v1278, 7
    %v1280 = vsub.s32 0, %v1279
    %v1281 = vrot.slane %v1276, %v1280
    %v1287 = vunpack.c.l.b16 %v1272
    %v1288 = vunpack.c.l.b16 %v1273
    %v1289 = vunpack.c.l.b16 %v1274
    %v1290 = vunpack.c.l.b16 %v1275
    %v1291 = vpack.c.b16 %v1288, %v1287
    %v1292 = vpack.c.b16 %v1290, %v1289
    %v1296 = vsel %vm375, %v1268, 0
    %v1299 = vsel %vm375, %v1269, 0
    %v1302 = vsel %vm375, %v1270, 0
    %v1305 = vsel %vm375, %v1271, 0
    %1307 = vmatprep.subr.bf16.mxu0 0
    %1308 = vmatpush1.bf16.msra.mxu0 %v1291
    %1309 = vmatprep.subr.bf16.mxu0 0
    %1310 = vmatpush1.bf16.msra.mxu0 %v1292
    %1311 = vmatprep.subr.bf16.mxu0 0
    %1312 = vmatpush1.bf16.msra.mxu0 0
    %1313 = vmatprep.subr.bf16.mxu0 0
    %1314 = vmatpush1.bf16.msra.mxu0 0
    %1315 = vmatprep.subr.bf16.mxu0 0
    %1316 = vmatpush1.bf16.msra.mxu0 0
    %1317 = vmatprep.subr.bf16.mxu0 0
    %1318 = vmatpush1.bf16.msra.mxu0 0
    %1319 = vmatprep.subr.bf16.mxu0 0
    %1320 = vmatpush1.bf16.msra.mxu0 0
    %1321 = vmatprep.subr.bf16.mxu0 0
    %1322 = vmatpush1.bf16.msra.mxu0 0
    %1323 = vmatprep.subr.bf16.mxu0 0
    %1324 = vmatpush1.bf16.msra.mxu0 0
    %1325 = vmatprep.subr.bf16.mxu0 0
    %1326 = vmatpush1.bf16.msra.mxu0 0
    %1327 = vmatprep.subr.bf16.mxu0 0
    %1328 = vmatpush1.bf16.msra.mxu0 0
    %1329 = vmatprep.subr.bf16.mxu0 0
    %1330 = vmatpush1.bf16.msra.mxu0 0
    %1331 = vmatprep.subr.bf16.mxu0 0
    %1332 = vmatpush1.bf16.msra.mxu0 0
    %1333 = vmatprep.subr.bf16.mxu0 0
    %1334 = vmatpush1.bf16.msra.mxu0 0
    %1335 = vmatprep.subr.bf16.mxu0 0
    %1336 = vmatpush1.bf16.msra.mxu0 0
    %1337 = vmatprep.subr.bf16.mxu0 0
    %1338 = vmatpush1.bf16.msra.mxu0 0
    %1339 = vmatprep.mubr.bf16.mxu0 0
    %1340 = vmatmul.mubr.bf16.gmra.mrb[0].mxu0 %v1296
    %v1341 = vpop.f32.mrb[0].mxu0
    %v1342 = vadd.f32 %v1281, %v1341
    %v1343 = vpop.f32.mrb[0].mxu0
    %v1344 = vpop.f32.mrb[0].mxu0
    %v1345 = vadd.f32 %v1281, %v1344
    %v1346 = vpop.f32.mrb[0].mxu0
    %1347 = vmatprep.mubr.bf16.mxu0 0
    %1348 = vmatmul.mubr.bf16.gmra.mrb[0].mxu0 %v1299
    %v1349 = vpop.f32.mrb[0].mxu0
    %v1350 = vadd.f32 %v1281, %v1349
    %v1351 = vpop.f32.mrb[0].mxu0
    %v1352 = vpop.f32.mrb[0].mxu0
    %v1353 = vadd.f32 %v1281, %v1352
    %v1354 = vpop.f32.mrb[0].mxu0
    %1355 = vmatprep.mubr.bf16.mxu0 0
    %1356 = vmatmul.mubr.bf16.gmra.mrb[0].mxu0 %v1302
    %v1357 = vpop.f32.mrb[0].mxu0
    %v1358 = vadd.f32 %v1281, %v1357
    %v1359 = vpop.f32.mrb[0].mxu0
    %v1360 = vpop.f32.mrb[0].mxu0
    %v1361 = vadd.f32 %v1281, %v1360
    %v1362 = vpop.f32.mrb[0].mxu0
    %1363 = vmatprep.mubr.bf16.mxu0 0
    %1364 = vmatmul.mubr.bf16.gmra.mrb[0].mxu0 %v1305
    %v1365 = vpop.f32.mrb[0].mxu0
    %v1366 = vadd.f32 %v1281, %v1365
    %v1367 = vpop.f32.mrb[0].mxu0
    %v1368 = vpop.f32.mrb[0].mxu0
    %v1369 = vadd.f32 %v1281, %v1368
    %v1370 = vpop.f32.mrb[0].mxu0
    %1371 = vdwg.mxu0
    %1372 = vst [vmem:[%s7] sm:$0xff] %v1342
    %1373 = vst [vmem:[%s7 + $0x8] sm:$0xff] %v1345
    %1374 = vst [vmem:[%s7 + $0x10] sm:$0xff] %v1350
    %1375 = vst [vmem:[%s7 + $0x18] sm:$0xff] %v1353
    %1376 = vst [vmem:[%s7 + $0x20] sm:$0xff] %v1358
    %1377 = vst [vmem:[%s7 + $0x28] sm:$0xff] %v1361
    %1378 = vst [vmem:[%s7 + $0x30] sm:$0xff] %v1366
    %1379 = vst [vmem:[%s7 + $0x38] sm:$0xff] %v1369
    // Predicated region
    $region34: #{language_detector_forward.1} parent=1 // pred_check
      _
    $region35: #{language_detector_forward.1} parent=1 // pred_check_branch
      %1381 = sbr.rel (0) target = $region37
    $region36: #{language_detector_forward.1} parent=1 // pred_region
      _
    $region37: #{language_detector_forward.1} parent=1 // pred_fallthru
      _
    // Predicated region
    $region38: #{language_detector_forward.1} parent=1 // pred_check
      _
    $region39: #{language_detector_forward.1} parent=1 // pred_check_branch
      %1383 = sbr.rel (0) target = $region41
    $region40: #{language_detector_forward.1} parent=1 // pred_region
      _
    $region41: #{language_detector_forward.1} parent=1 // pred_fallthru
      _
    %1384 = vsyncpa [#allocation5], 1

</llo_original>
